<compile_context>
chip_gen: v6e
topology: v6e:2x2x1
jax: 0.10.0
libtpu: 0.0.40
codegen_flags: <defaults>
</compile_context>

<pallas_src>
import jax
import jax.numpy as jnp
from jax.experimental import pallas as pl
from jax.experimental.pallas import tpu as pltpu


def _gconv_kernel(x_ref, w_emb_ref, b_emb_ref, w_ref, b_ref, w_fc_ref,
                  b_fc_ref, out_ref):
    # Embedding: bf16 x bf16 MXU dot, f32 accumulation, f32 bias add.
    h = jnp.dot(x_ref[...].astype(jnp.bfloat16), w_emb_ref[...],
                preferred_element_type=jnp.float32) + b_emb_ref[...]

    # Stack of n_layer Linear(F, F) layers (static unroll; weights stay
    # VMEM-resident across the whole grid).  Activations are re-cast to bf16
    # only at the MXU inputs; everything elementwise stays f32.
    n_layer = w_ref.shape[0]
    for i in range(n_layer):
        h = jnp.dot(h.astype(jnp.bfloat16), w_ref[i],
                    preferred_element_type=jnp.float32) + b_ref[i]

    # Final fc, zero-padded to 128 output lanes -> unmasked lane-dense store.
    out_ref[...] = jnp.dot(h.astype(jnp.bfloat16), w_fc_ref[...],
                           preferred_element_type=jnp.float32) + b_fc_ref[...]


def _round_up(v, m):
    return (v + m - 1) // m * m


def gconv_regressor(x, A, params, *, target_tile_rows=512):
    """Forward pass of GConvRegressor. x: (B, N, 16); A unused by the module."""
    del A  # the reference forward never uses the adjacency
    B, N, Fin = x.shape
    nf = params["w_emb"].shape[1]
    n_layer = params["w_stack"].shape[0]

    # No nonlinearity anywhere in the stack => the node-mean commutes with
    # every affine layer.  Pool over nodes up front and run embedding +
    # n_layer Linears + fc on (B, Fin) rows instead of (B*N, Fin).
    x_pooled = x.astype(jnp.float32).mean(axis=1)        # (B, Fin)

    # Row tile: multiple of 8 sublanes, capped at target_tile_rows.
    tile_m = min(_round_up(target_tile_rows, 8), _round_up(B, 8))
    num_tiles = pl.cdiv(B, tile_m)
    b_pad = num_tiles * tile_m
    if b_pad != B:
        x_pooled = jnp.concatenate(
            [x_pooled, jnp.zeros((b_pad - B, Fin), jnp.float32)], axis=0)

    # bf16 weights (MXU-native operands, half the weight DMA); f32 biases.
    w_emb = params["w_emb"].astype(jnp.bfloat16)
    w_stack = params["w_stack"].astype(jnp.bfloat16)
    b_emb = params["b_emb"].astype(jnp.float32)
    b_stack = params["b_stack"].astype(jnp.float32)
    # fc padded to 128 output lanes; only column 0 holds the real output.
    w_fc_pad = jnp.zeros((nf, 128), jnp.bfloat16).at[:, 0:1].set(
        params["w_fc"].astype(jnp.bfloat16))
    b_fc_pad = jnp.zeros((1, 128), jnp.float32).at[:, 0:1].set(
        params["b_fc"].astype(jnp.float32))

    flops = 2 * b_pad * (Fin * nf + n_layer * nf * nf + nf * 128)
    bytes_accessed = (x_pooled.size * 4 + b_pad * 128 * 4
                      + w_emb.size * 2 + w_stack.size * 2 + w_fc_pad.size * 2
                      + b_emb.size * 4 + b_stack.size * 4 + b_fc_pad.size * 4)

    out_pad = pl.pallas_call(
        _gconv_kernel,
        out_shape=jax.ShapeDtypeStruct((b_pad, 128), jnp.float32),
        grid=(num_tiles,),
        in_specs=[
            # Row-tiled (pooled) input: one tile of whole graphs per step.
            pl.BlockSpec((tile_m, Fin), lambda i: (i, 0)),
            # Weights/biases: constant index maps -> DMA'd once, VMEM-resident.
            # (pl.Buffered(1) would trim the second buffer copy on v7x; the
            #  default double-buffer is well under budget at these sizes.)
            pl.BlockSpec((Fin, nf), lambda i: (0, 0)),
            pl.BlockSpec((1, nf), lambda i: (0, 0)),
            pl.BlockSpec((n_layer, nf, nf), lambda i: (0, 0, 0)),
            pl.BlockSpec((n_layer, 1, nf), lambda i: (0, 0, 0)),
            pl.BlockSpec((nf, 128), lambda i: (0, 0)),
            pl.BlockSpec((1, 128), lambda i: (0, 0)),
        ],
        out_specs=pl.BlockSpec((tile_m, 128), lambda i: (i, 0)),
        compiler_params=pltpu.CompilerParams(
            dimension_semantics=("parallel",)),
        cost_estimate=pl.CostEstimate(
            flops=flops, transcendentals=0, bytes_accessed=bytes_accessed),
    )(x_pooled, w_emb, b_emb, w_stack, b_stack, w_fc_pad, b_fc_pad)

    # Drop padded rows and the 127 padding output lanes.
    return out_pad[:B, 0:1]


def init_params(key, n_feature=128, n_layer=10, in_features=16):
    ks = jax.random.split(key, 6)
    scale_emb = 1.0 / jnp.sqrt(in_features)
    scale_hid = 1.0 / jnp.sqrt(n_feature)
    return {
        "w_emb": jax.random.normal(ks[0], (in_features, n_feature),
                                   jnp.float32) * scale_emb,
        "b_emb": jax.random.normal(ks[1], (1, n_feature),
                                   jnp.float32) * scale_emb,
        "w_stack": jax.random.normal(ks[2], (n_layer, n_feature, n_feature),
                                     jnp.float32) * scale_hid,
        "b_stack": jax.random.normal(ks[3], (n_layer, 1, n_feature),
                                     jnp.float32) * scale_hid,
        "w_fc": jax.random.normal(ks[4], (n_feature, 1),
                                  jnp.float32) * scale_hid,
        "b_fc": jax.random.normal(ks[5], (1, 1), jnp.float32) * scale_hid,
    }


def reference_forward(x, params):
    """Pure-JAX f32 reference mirroring the PyTorch module semantics."""
    h = x @ params["w_emb"] + params["b_emb"][0]          # (B, N, F)
    for i in range(params["w_stack"].shape[0]):
        h = h @ params["w_stack"][i] + params["b_stack"][i, 0]
    h = h.mean(axis=1)                                    # (B, F)
    return h @ params["w_fc"] + params["b_fc"][0]         # (B, 1)


def precision_matched_reference(x, params):
    """Mirrors the kernel's dataflow: pool first, bf16 MXU operands, f32 accum."""
    def bdot(a, b):
        return jnp.dot(a.astype(jnp.bfloat16), b.astype(jnp.bfloat16),
                       preferred_element_type=jnp.float32)
    h = x.astype(jnp.float32).mean(axis=1)                # (B, 16)
    h = bdot(h, params["w_emb"]) + params["b_emb"][0]
    for i in range(params["w_stack"].shape[0]):
        h = bdot(h, params["w_stack"][i]) + params["b_stack"][i, 0]
    return bdot(h, params["w_fc"]) + params["b_fc"][0]


if __name__ == "__main__":
    key = jax.random.PRNGKey(0)
    k_x, k_a, k_p = jax.random.split(key, 3)

    B, N, Fin = 2, 8, 16          # batch (graphs), nodes per graph, input dim
    n_feature, n_layer = 128, 10  # module defaults

    x = jax.random.normal(k_x, (B, N, Fin), jnp.float32)
    A = jax.random.normal(k_a, (B, N, N), jnp.float32)   # unused by forward
    params = init_params(k_p, n_feature=n_feature, n_layer=n_layer,
                         in_features=Fin)

    out = jax.block_until_ready(gconv_regressor(x, A, params))
    assert out.shape == (B, 1)

    # Tight check against a reference using the kernel's exact precision
    # policy (bf16 dot operands, f32 accumulation, mean hoisted first).
    ref_bf16 = precision_matched_reference(x, params)
    assert jnp.allclose(out, ref_bf16, atol=1e-3, rtol=1e-3)

    # Loose sanity check against the exact f32 PyTorch-order reference
    # (11 bf16-operand dots => ~1e-2 expected drift on O(1) outputs).
    ref_f32 = reference_forward(x, params)
    assert jnp.allclose(out, ref_f32, atol=1e-1, rtol=1e-1)

    print("KERNEL_OK")
</pallas_src>

<mosaic_0001>
module attributes {stable_mosaic.version = 11 : i64} {
  func.func @_gconv_kernel(%arg0: i32, %arg1: memref<8x16xf32, #tpu.memory_space<vmem>>, %arg2: memref<16x128xbf16, #tpu.memory_space<vmem>>, %arg3: memref<1x128xf32, #tpu.memory_space<vmem>>, %arg4: memref<10x128x128xbf16, #tpu.memory_space<vmem>>, %arg5: memref<10x1x128xf32, #tpu.memory_space<vmem>>, %arg6: memref<128x128xbf16, #tpu.memory_space<vmem>>, %arg7: memref<1x128xf32, #tpu.memory_space<vmem>>, %arg8: memref<8x128xf32, #tpu.memory_space<vmem>>) attributes {dimension_semantics = [#tpu.dimension_semantics<parallel>], iteration_bounds = array<i64: 1>, scalar_prefetch = 0 : i64, scratch_operands = 0 : i64, tpu.core_type = #tpu.core_type<tc>, window_params = [{transform_indices = @transform_0, window_bounds = array<i64: 8, 16>}, {pipeline_mode = #tpu.pipeline_mode<synchronous>, transform_indices = @transform_1, window_bounds = array<i64: 16, 128>}, {pipeline_mode = #tpu.pipeline_mode<synchronous>, transform_indices = @transform_2, window_bounds = array<i64: 1, 128>}, {pipeline_mode = #tpu.pipeline_mode<synchronous>, transform_indices = @transform_3, window_bounds = array<i64: 10, 128, 128>}, {pipeline_mode = #tpu.pipeline_mode<synchronous>, transform_indices = @transform_4, window_bounds = array<i64: 10, 1, 128>}, {pipeline_mode = #tpu.pipeline_mode<synchronous>, transform_indices = @transform_5, window_bounds = array<i64: 128, 128>}, {pipeline_mode = #tpu.pipeline_mode<synchronous>, transform_indices = @transform_6, window_bounds = array<i64: 1, 128>}, {transform_indices = @transform_7, window_bounds = array<i64: 8, 128>}]} {
    %c0 = arith.constant 0 : index
    %c0_0 = arith.constant 0 : index
    %0 = vector.load %arg1[%c0, %c0_0] : memref<8x16xf32, #tpu.memory_space<vmem>>, vector<8x16xf32>
    %1 = arith.truncf %0 : vector<8x16xf32> to vector<8x16xbf16>
    %c0_1 = arith.constant 0 : index
    %c0_2 = arith.constant 0 : index
    %2 = vector.load %arg2[%c0_1, %c0_2] : memref<16x128xbf16, #tpu.memory_space<vmem>>, vector<16x128xbf16>
    %cst = arith.constant dense<0.000000e+00> : vector<8x128xf32>
    %3 = tpu.matmul %1, %2, %cst {dimension_numbers = #tpu.dot_dimension_numbers<[1], [0], [0], [1], [0, 0, 1, 1], [], []>} : vector<8x16xbf16>, vector<16x128xbf16>, vector<8x128xf32> -> vector<8x128xf32>
    %c0_3 = arith.constant 0 : index
    %c0_4 = arith.constant 0 : index
    %4 = vector.load %arg3[%c0_3, %c0_4] : memref<1x128xf32, #tpu.memory_space<vmem>>, vector<1x128xf32>
    %5 = vector.broadcast %4 : vector<1x128xf32> to vector<8x128xf32>
    %6 = arith.addf %3, %5 : vector<8x128xf32>
    %7 = arith.truncf %6 : vector<8x128xf32> to vector<8x128xbf16>
    %c0_5 = arith.constant 0 : index
    %c0_6 = arith.constant 0 : index
    %c0_7 = arith.constant 0 : index
    %8 = vector.load %arg4[%c0_5, %c0_6, %c0_7] : memref<10x128x128xbf16, #tpu.memory_space<vmem>>, vector<1x128x128xbf16>
    %9 = vector.shape_cast %8 : vector<1x128x128xbf16> to vector<128x128xbf16>
    %cst_8 = arith.constant dense<0.000000e+00> : vector<8x128xf32>
    %10 = tpu.matmul %7, %9, %cst_8 {dimension_numbers = #tpu.dot_dimension_numbers<[1], [0], [0], [1], [0, 0, 1, 1], [], []>} : vector<8x128xbf16>, vector<128x128xbf16>, vector<8x128xf32> -> vector<8x128xf32>
    %c0_9 = arith.constant 0 : index
    %c0_10 = arith.constant 0 : index
    %c0_11 = arith.constant 0 : index
    %11 = vector.load %arg5[%c0_9, %c0_10, %c0_11] : memref<10x1x128xf32, #tpu.memory_space<vmem>>, vector<1x1x128xf32>
    %12 = vector.shape_cast %11 : vector<1x1x128xf32> to vector<1x128xf32>
    %13 = vector.broadcast %12 : vector<1x128xf32> to vector<8x128xf32>
    %14 = arith.addf %10, %13 : vector<8x128xf32>
    %15 = arith.truncf %14 : vector<8x128xf32> to vector<8x128xbf16>
    %c1 = arith.constant 1 : index
    %c0_12 = arith.constant 0 : index
    %c0_13 = arith.constant 0 : index
    %16 = vector.load %arg4[%c1, %c0_12, %c0_13] : memref<10x128x128xbf16, #tpu.memory_space<vmem>>, vector<1x128x128xbf16>
    %17 = vector.shape_cast %16 : vector<1x128x128xbf16> to vector<128x128xbf16>
    %cst_14 = arith.constant dense<0.000000e+00> : vector<8x128xf32>
    %18 = tpu.matmul %15, %17, %cst_14 {dimension_numbers = #tpu.dot_dimension_numbers<[1], [0], [0], [1], [0, 0, 1, 1], [], []>} : vector<8x128xbf16>, vector<128x128xbf16>, vector<8x128xf32> -> vector<8x128xf32>
    %c1_15 = arith.constant 1 : index
    %c0_16 = arith.constant 0 : index
    %c0_17 = arith.constant 0 : index
    %19 = vector.load %arg5[%c1_15, %c0_16, %c0_17] : memref<10x1x128xf32, #tpu.memory_space<vmem>>, vector<1x1x128xf32>
    %20 = vector.shape_cast %19 : vector<1x1x128xf32> to vector<1x128xf32>
    %21 = vector.broadcast %20 : vector<1x128xf32> to vector<8x128xf32>
    %22 = arith.addf %18, %21 : vector<8x128xf32>
    %23 = arith.truncf %22 : vector<8x128xf32> to vector<8x128xbf16>
    %c2 = arith.constant 2 : index
    %c0_18 = arith.constant 0 : index
    %c0_19 = arith.constant 0 : index
    %24 = vector.load %arg4[%c2, %c0_18, %c0_19] : memref<10x128x128xbf16, #tpu.memory_space<vmem>>, vector<1x128x128xbf16>
    %25 = vector.shape_cast %24 : vector<1x128x128xbf16> to vector<128x128xbf16>
    %cst_20 = arith.constant dense<0.000000e+00> : vector<8x128xf32>
    %26 = tpu.matmul %23, %25, %cst_20 {dimension_numbers = #tpu.dot_dimension_numbers<[1], [0], [0], [1], [0, 0, 1, 1], [], []>} : vector<8x128xbf16>, vector<128x128xbf16>, vector<8x128xf32> -> vector<8x128xf32>
    %c2_21 = arith.constant 2 : index
    %c0_22 = arith.constant 0 : index
    %c0_23 = arith.constant 0 : index
    %27 = vector.load %arg5[%c2_21, %c0_22, %c0_23] : memref<10x1x128xf32, #tpu.memory_space<vmem>>, vector<1x1x128xf32>
    %28 = vector.shape_cast %27 : vector<1x1x128xf32> to vector<1x128xf32>
    %29 = vector.broadcast %28 : vector<1x128xf32> to vector<8x128xf32>
    %30 = arith.addf %26, %29 : vector<8x128xf32>
    %31 = arith.truncf %30 : vector<8x128xf32> to vector<8x128xbf16>
    %c3 = arith.constant 3 : index
    %c0_24 = arith.constant 0 : index
    %c0_25 = arith.constant 0 : index
    %32 = vector.load %arg4[%c3, %c0_24, %c0_25] : memref<10x128x128xbf16, #tpu.memory_space<vmem>>, vector<1x128x128xbf16>
    %33 = vector.shape_cast %32 : vector<1x128x128xbf16> to vector<128x128xbf16>
    %cst_26 = arith.constant dense<0.000000e+00> : vector<8x128xf32>
    %34 = tpu.matmul %31, %33, %cst_26 {dimension_numbers = #tpu.dot_dimension_numbers<[1], [0], [0], [1], [0, 0, 1, 1], [], []>} : vector<8x128xbf16>, vector<128x128xbf16>, vector<8x128xf32> -> vector<8x128xf32>
    %c3_27 = arith.constant 3 : index
    %c0_28 = arith.constant 0 : index
    %c0_29 = arith.constant 0 : index
    %35 = vector.load %arg5[%c3_27, %c0_28, %c0_29] : memref<10x1x128xf32, #tpu.memory_space<vmem>>, vector<1x1x128xf32>
    %36 = vector.shape_cast %35 : vector<1x1x128xf32> to vector<1x128xf32>
    %37 = vector.broadcast %36 : vector<1x128xf32> to vector<8x128xf32>
    %38 = arith.addf %34, %37 : vector<8x128xf32>
    %39 = arith.truncf %38 : vector<8x128xf32> to vector<8x128xbf16>
    %c4 = arith.constant 4 : index
    %c0_30 = arith.constant 0 : index
    %c0_31 = arith.constant 0 : index
    %40 = vector.load %arg4[%c4, %c0_30, %c0_31] : memref<10x128x128xbf16, #tpu.memory_space<vmem>>, vector<1x128x128xbf16>
    %41 = vector.shape_cast %40 : vector<1x128x128xbf16> to vector<128x128xbf16>
    %cst_32 = arith.constant dense<0.000000e+00> : vector<8x128xf32>
    %42 = tpu.matmul %39, %41, %cst_32 {dimension_numbers = #tpu.dot_dimension_numbers<[1], [0], [0], [1], [0, 0, 1, 1], [], []>} : vector<8x128xbf16>, vector<128x128xbf16>, vector<8x128xf32> -> vector<8x128xf32>
    %c4_33 = arith.constant 4 : index
    %c0_34 = arith.constant 0 : index
    %c0_35 = arith.constant 0 : index
    %43 = vector.load %arg5[%c4_33, %c0_34, %c0_35] : memref<10x1x128xf32, #tpu.memory_space<vmem>>, vector<1x1x128xf32>
    %44 = vector.shape_cast %43 : vector<1x1x128xf32> to vector<1x128xf32>
    %45 = vector.broadcast %44 : vector<1x128xf32> to vector<8x128xf32>
    %46 = arith.addf %42, %45 : vector<8x128xf32>
    %47 = arith.truncf %46 : vector<8x128xf32> to vector<8x128xbf16>
    %c5 = arith.constant 5 : index
    %c0_36 = arith.constant 0 : index
    %c0_37 = arith.constant 0 : index
    %48 = vector.load %arg4[%c5, %c0_36, %c0_37] : memref<10x128x128xbf16, #tpu.memory_space<vmem>>, vector<1x128x128xbf16>
    %49 = vector.shape_cast %48 : vector<1x128x128xbf16> to vector<128x128xbf16>
    %cst_38 = arith.constant dense<0.000000e+00> : vector<8x128xf32>
    %50 = tpu.matmul %47, %49, %cst_38 {dimension_numbers = #tpu.dot_dimension_numbers<[1], [0], [0], [1], [0, 0, 1, 1], [], []>} : vector<8x128xbf16>, vector<128x128xbf16>, vector<8x128xf32> -> vector<8x128xf32>
    %c5_39 = arith.constant 5 : index
    %c0_40 = arith.constant 0 : index
    %c0_41 = arith.constant 0 : index
    %51 = vector.load %arg5[%c5_39, %c0_40, %c0_41] : memref<10x1x128xf32, #tpu.memory_space<vmem>>, vector<1x1x128xf32>
    %52 = vector.shape_cast %51 : vector<1x1x128xf32> to vector<1x128xf32>
    %53 = vector.broadcast %52 : vector<1x128xf32> to vector<8x128xf32>
    %54 = arith.addf %50, %53 : vector<8x128xf32>
    %55 = arith.truncf %54 : vector<8x128xf32> to vector<8x128xbf16>
    %c6 = arith.constant 6 : index
    %c0_42 = arith.constant 0 : index
    %c0_43 = arith.constant 0 : index
    %56 = vector.load %arg4[%c6, %c0_42, %c0_43] : memref<10x128x128xbf16, #tpu.memory_space<vmem>>, vector<1x128x128xbf16>
    %57 = vector.shape_cast %56 : vector<1x128x128xbf16> to vector<128x128xbf16>
    %cst_44 = arith.constant dense<0.000000e+00> : vector<8x128xf32>
    %58 = tpu.matmul %55, %57, %cst_44 {dimension_numbers = #tpu.dot_dimension_numbers<[1], [0], [0], [1], [0, 0, 1, 1], [], []>} : vector<8x128xbf16>, vector<128x128xbf16>, vector<8x128xf32> -> vector<8x128xf32>
    %c6_45 = arith.constant 6 : index
    %c0_46 = arith.constant 0 : index
    %c0_47 = arith.constant 0 : index
    %59 = vector.load %arg5[%c6_45, %c0_46, %c0_47] : memref<10x1x128xf32, #tpu.memory_space<vmem>>, vector<1x1x128xf32>
    %60 = vector.shape_cast %59 : vector<1x1x128xf32> to vector<1x128xf32>
    %61 = vector.broadcast %60 : vector<1x128xf32> to vector<8x128xf32>
    %62 = arith.addf %58, %61 : vector<8x128xf32>
    %63 = arith.truncf %62 : vector<8x128xf32> to vector<8x128xbf16>
    %c7 = arith.constant 7 : index
    %c0_48 = arith.constant 0 : index
    %c0_49 = arith.constant 0 : index
    %64 = vector.load %arg4[%c7, %c0_48, %c0_49] : memref<10x128x128xbf16, #tpu.memory_space<vmem>>, vector<1x128x128xbf16>
    %65 = vector.shape_cast %64 : vector<1x128x128xbf16> to vector<128x128xbf16>
    %cst_50 = arith.constant dense<0.000000e+00> : vector<8x128xf32>
    %66 = tpu.matmul %63, %65, %cst_50 {dimension_numbers = #tpu.dot_dimension_numbers<[1], [0], [0], [1], [0, 0, 1, 1], [], []>} : vector<8x128xbf16>, vector<128x128xbf16>, vector<8x128xf32> -> vector<8x128xf32>
    %c7_51 = arith.constant 7 : index
    %c0_52 = arith.constant 0 : index
    %c0_53 = arith.constant 0 : index
    %67 = vector.load %arg5[%c7_51, %c0_52, %c0_53] : memref<10x1x128xf32, #tpu.memory_space<vmem>>, vector<1x1x128xf32>
    %68 = vector.shape_cast %67 : vector<1x1x128xf32> to vector<1x128xf32>
    %69 = vector.broadcast %68 : vector<1x128xf32> to vector<8x128xf32>
    %70 = arith.addf %66, %69 : vector<8x128xf32>
    %71 = arith.truncf %70 : vector<8x128xf32> to vector<8x128xbf16>
    %c8 = arith.constant 8 : index
    %c0_54 = arith.constant 0 : index
    %c0_55 = arith.constant 0 : index
    %72 = vector.load %arg4[%c8, %c0_54, %c0_55] : memref<10x128x128xbf16, #tpu.memory_space<vmem>>, vector<1x128x128xbf16>
    %73 = vector.shape_cast %72 : vector<1x128x128xbf16> to vector<128x128xbf16>
    %cst_56 = arith.constant dense<0.000000e+00> : vector<8x128xf32>
    %74 = tpu.matmul %71, %73, %cst_56 {dimension_numbers = #tpu.dot_dimension_numbers<[1], [0], [0], [1], [0, 0, 1, 1], [], []>} : vector<8x128xbf16>, vector<128x128xbf16>, vector<8x128xf32> -> vector<8x128xf32>
    %c8_57 = arith.constant 8 : index
    %c0_58 = arith.constant 0 : index
    %c0_59 = arith.constant 0 : index
    %75 = vector.load %arg5[%c8_57, %c0_58, %c0_59] : memref<10x1x128xf32, #tpu.memory_space<vmem>>, vector<1x1x128xf32>
    %76 = vector.shape_cast %75 : vector<1x1x128xf32> to vector<1x128xf32>
    %77 = vector.broadcast %76 : vector<1x128xf32> to vector<8x128xf32>
    %78 = arith.addf %74, %77 : vector<8x128xf32>
    %79 = arith.truncf %78 : vector<8x128xf32> to vector<8x128xbf16>
    %c9 = arith.constant 9 : index
    %c0_60 = arith.constant 0 : index
    %c0_61 = arith.constant 0 : index
    %80 = vector.load %arg4[%c9, %c0_60, %c0_61] : memref<10x128x128xbf16, #tpu.memory_space<vmem>>, vector<1x128x128xbf16>
    %81 = vector.shape_cast %80 : vector<1x128x128xbf16> to vector<128x128xbf16>
    %cst_62 = arith.constant dense<0.000000e+00> : vector<8x128xf32>
    %82 = tpu.matmul %79, %81, %cst_62 {dimension_numbers = #tpu.dot_dimension_numbers<[1], [0], [0], [1], [0, 0, 1, 1], [], []>} : vector<8x128xbf16>, vector<128x128xbf16>, vector<8x128xf32> -> vector<8x128xf32>
    %c9_63 = arith.constant 9 : index
    %c0_64 = arith.constant 0 : index
    %c0_65 = arith.constant 0 : index
    %83 = vector.load %arg5[%c9_63, %c0_64, %c0_65] : memref<10x1x128xf32, #tpu.memory_space<vmem>>, vector<1x1x128xf32>
    %84 = vector.shape_cast %83 : vector<1x1x128xf32> to vector<1x128xf32>
    %85 = vector.broadcast %84 : vector<1x128xf32> to vector<8x128xf32>
    %86 = arith.addf %82, %85 : vector<8x128xf32>
    %87 = arith.truncf %86 : vector<8x128xf32> to vector<8x128xbf16>
    %c0_66 = arith.constant 0 : index
    %c0_67 = arith.constant 0 : index
    %88 = vector.load %arg6[%c0_66, %c0_67] : memref<128x128xbf16, #tpu.memory_space<vmem>>, vector<128x128xbf16>
    %cst_68 = arith.constant dense<0.000000e+00> : vector<8x128xf32>
    %89 = tpu.matmul %87, %88, %cst_68 {dimension_numbers = #tpu.dot_dimension_numbers<[1], [0], [0], [1], [0, 0, 1, 1], [], []>} : vector<8x128xbf16>, vector<128x128xbf16>, vector<8x128xf32> -> vector<8x128xf32>
    %c0_69 = arith.constant 0 : index
    %c0_70 = arith.constant 0 : index
    %90 = vector.load %arg7[%c0_69, %c0_70] : memref<1x128xf32, #tpu.memory_space<vmem>>, vector<1x128xf32>
    %91 = vector.broadcast %90 : vector<1x128xf32> to vector<8x128xf32>
    %92 = arith.addf %89, %91 : vector<8x128xf32>
    %c0_71 = arith.constant 0 : index
    %c0_72 = arith.constant 0 : index
    %93 = vector.load %arg8[%c0_71, %c0_72] : memref<8x128xf32, #tpu.memory_space<vmem>>, vector<8x128xf32>
    tpu.vector_store %arg8[%c0_71, %c0_72], %92 {strides = array<i32>} : memref<8x128xf32, #tpu.memory_space<vmem>>, vector<8x128xf32>,
    return
  }
  func.func @transform_0(%arg0: i32) -> (i32, i32) {
    %c0_i32 = arith.constant 0 : i32
    %c0_i32_0 = arith.constant 0 : i32
    return %arg0, %c0_i32 : i32, i32
  }
  func.func @transform_1(%arg0: i32) -> (i32, i32) {
    %c0_i32 = arith.constant 0 : i32
    %c0_i32_0 = arith.constant 0 : i32
    %c0_i32_1 = arith.constant 0 : i32
    return %c0_i32, %c0_i32_0 : i32, i32
  }
  func.func @transform_2(%arg0: i32) -> (i32, i32) {
    %c0_i32 = arith.constant 0 : i32
    %c0_i32_0 = arith.constant 0 : i32
    %c0_i32_1 = arith.constant 0 : i32
    return %c0_i32, %c0_i32_0 : i32, i32
  }
  func.func @transform_3(%arg0: i32) -> (i32, i32, i32) {
    %c0_i32 = arith.constant 0 : i32
    %c0_i32_0 = arith.constant 0 : i32
    %c0_i32_1 = arith.constant 0 : i32
    %c0_i32_2 = arith.constant 0 : i32
    return %c0_i32, %c0_i32_0, %c0_i32_1 : i32, i32, i32
  }
  func.func @transform_4(%arg0: i32) -> (i32, i32, i32) {
    %c0_i32 = arith.constant 0 : i32
    %c0_i32_0 = arith.constant 0 : i32
    %c0_i32_1 = arith.constant 0 : i32
    %c0_i32_2 = arith.constant 0 : i32
    return %c0_i32, %c0_i32_0, %c0_i32_1 : i32, i32, i32
  }
  func.func @transform_5(%arg0: i32) -> (i32, i32) {
    %c0_i32 = arith.constant 0 : i32
    %c0_i32_0 = arith.constant 0 : i32
    %c0_i32_1 = arith.constant 0 : i32
    return %c0_i32, %c0_i32_0 : i32, i32
  }
  func.func @transform_6(%arg0: i32) -> (i32, i32) {
    %c0_i32 = arith.constant 0 : i32
    %c0_i32_0 = arith.constant 0 : i32
    %c0_i32_1 = arith.constant 0 : i32
    return %c0_i32, %c0_i32_0 : i32, i32
  }
  func.func @transform_7(%arg0: i32) -> (i32, i32) {
    %c0_i32 = arith.constant 0 : i32
    %c0_i32_0 = arith.constant 0 : i32
    return %arg0, %c0_i32 : i32, i32
  }
}

</mosaic_0001>

<llo_original>
// kernel: tpu_custom_call.1
$region0: #{tpu_custom_call.1}
  #allocation0 [shape = 'u32[]', space=smem, size = 0x4, offset = 0x4, fixed_abs, tag = 'smem constant byte address 0x4 - core index']
  #allocation1 [shape = 'u32[144,128]{1,0:T(1,128)}', space=vmem, size = 0x12000, scoped, tag = 'internal scratch']
  %s0 = inlined_call_operand.hbm [shape: f32[8,16], index: 0, kind: input, shape index: {}]
  %s1 = inlined_call_operand.hbm [shape: bf16[16,128], index: 1, kind: input, shape index: {}]
  %s2 = inlined_call_operand.vmem [shape: f32[1,128], index: 2, kind: input, shape index: {}]
  %s3 = inlined_call_operand.hbm [shape: bf16[10,128,128], index: 3, kind: input, shape index: {}]
  %s4 = inlined_call_operand.hbm [shape: f32[10,1,128], index: 4, kind: input, shape index: {}]
  %s5 = inlined_call_operand.hbm [shape: bf16[128,128], index: 5, kind: input, shape index: {}]
  %s6 = inlined_call_operand.vmem [shape: f32[1,128], index: 6, kind: input, shape index: {}]
  %s7 = inlined_call_operand.hbm [shape: f32[8,128], index: 7, kind: output, shape index: {}]
  %s8 = sld [smem:[#allocation0]]
  $region58: #{tpu_custom_call.1} parent=0
    _
  %s10 = ssub.s32 1, %s8
  %s11 = scalar_select 0, %s10, %s8
  $region1: #{tpu_custom_call.1} parent=0
    #allocation2 [shape = 'u8[4096]{0}', space=vmem, size = 0x1000, scoped, tag = 'input window, operand 0, single buffered']
    #allocation3 [shape = 's32[1]{0}', space=sflag, size = 0x4, scoped, tag = 'scoped memory for tpu_custom_call.1']
    #allocation4 [shape = 's32[1]{0}', space=sflag, size = 0x4, scoped, tag = 'scoped memory for tpu_custom_call.1']
    #allocation5 [shape = 'u8[4096]{0}', space=vmem, size = 0x1000, scoped, tag = 'input window, operand 1, single buffered']
    #allocation6 [shape = 's32[1]{0}', space=sflag, size = 0x4, scoped, tag = 'scoped memory for tpu_custom_call.1']
    #allocation7 [shape = 'u8[327680]{0}', space=vmem, size = 0x50000, scoped, tag = 'input window, operand 3, single buffered']
    #allocation8 [shape = 'u8[5120]{0}', space=vmem, size = 0x1400, scoped, tag = 'input window, operand 4, single buffered']
    #allocation9 [shape = 's32[1]{0}', space=sflag, size = 0x4, scoped, tag = 'scoped memory for tpu_custom_call.1']
    #allocation10 [shape = 'u8[32768]{0}', space=vmem, size = 0x8000, scoped, tag = 'input window, operand 5, single buffered']
    #allocation11 [shape = 'u8[4096]{0}', space=vmem, size = 0x1000, scoped, tag = 'output window, operand 0, single buffered']
    %12 = vsyncpa [#allocation3], 0
    %13 = vsyncpa [#allocation6], 0
    %14 = vsyncpa [#allocation9], 0
    %15 = vsyncpa [#allocation4], 0
    // Predicated region
    $region2: #{tpu_custom_call.1} parent=1 // pred_check
      _
    $region3: #{tpu_custom_call.1} parent=1 // pred_check_branch
      %17 = sbr.rel (0) target = $region5
    $region4: #{tpu_custom_call.1} parent=1 // pred_region
      %s19 = ssub.s32 128, 128
      %20 = vsyncadd [#allocation3], %s19
      %s22 = sshll.u32 [#allocation2], 4
      %s23 = int_to_ptr.vmem [resolvable:$true] %s22
      %25 = dma.hbm_to_vmem [thread:$0]  %s0, 128, %s23, [#allocation3]
    $region5: #{tpu_custom_call.1} parent=1 // pred_fallthru
      _
    // Predicated region
    $region6: #{tpu_custom_call.1} parent=1 // pred_check
      _
    $region7: #{tpu_custom_call.1} parent=1 // pred_check_branch
      %27 = sbr.rel (0) target = $region9
    $region8: #{tpu_custom_call.1} parent=1 // pred_region
      %s29 = ssub.s32 128, 128
      %30 = vsyncadd [#allocation6], %s29
      %s31 = sshll.u32 [#allocation5], 4
      %s32 = int_to_ptr.vmem [resolvable:$true] %s31
      %37 = dma.hbm_to_vmem [thread:$0]  %s1, 128, %s32, [#allocation6], 64, 64, 4
    $region9: #{tpu_custom_call.1} parent=1 // pred_fallthru
      _
    // Predicated region
    $region10: #{tpu_custom_call.1} parent=1 // pred_check
      _
    $region11: #{tpu_custom_call.1} parent=1 // pred_check_branch
      %39 = sbr.rel (0) target = $region13
    $region12: #{tpu_custom_call.1} parent=1 // pred_region
      _
    $region13: #{tpu_custom_call.1} parent=1 // pred_fallthru
      _
    // Predicated region
    $region14: #{tpu_custom_call.1} parent=1 // pred_check
      _
    $region15: #{tpu_custom_call.1} parent=1 // pred_check_branch
      %41 = sbr.rel (0) target = $region17
    $region16: #{tpu_custom_call.1} parent=1 // pred_region
      %s43 = ssub.s32 10240, 10240
      %44 = vsyncadd [#allocation6], %s43
      %s45 = sshll.u32 [#allocation7], 4
      %s46 = int_to_ptr.vmem [resolvable:$true] %s45
      %51 = dma.hbm_to_vmem [thread:$0]  %s3, 10240, %s46, [#allocation6], 64, 64, 4
    $region17: #{tpu_custom_call.1} parent=1 // pred_fallthru
      _
    // Predicated region
    $region18: #{tpu_custom_call.1} parent=1 // pred_check
      _
    $region19: #{tpu_custom_call.1} parent=1 // pred_check_branch
      %53 = sbr.rel (0) target = $region21
    $region20: #{tpu_custom_call.1} parent=1 // pred_region
      %s55 = ssub.s32 160, 160
      %56 = vsyncadd [#allocation9], %s55
      %s57 = sshll.u32 [#allocation8], 4
      %s58 = int_to_ptr.vmem [resolvable:$true] %s57
      %63 = dma.hbm_to_vmem [thread:$0]  %s4, 160, %s58, [#allocation9], 16, 16, 1
    $region21: #{tpu_custom_call.1} parent=1 // pred_fallthru
      _
    // Predicated region
    $region22: #{tpu_custom_call.1} parent=1 // pred_check
      _
    $region23: #{tpu_custom_call.1} parent=1 // pred_check_branch
      %65 = sbr.rel (0) target = $region25
    $region24: #{tpu_custom_call.1} parent=1 // pred_region
      %s67 = ssub.s32 1024, 1024
      %68 = vsyncadd [#allocation9], %s67
      %s69 = sshll.u32 [#allocation10], 4
      %s70 = int_to_ptr.vmem [resolvable:$true] %s69
      %75 = dma.hbm_to_vmem [thread:$0]  %s5, 1024, %s70, [#allocation9], 64, 64, 4
    $region25: #{tpu_custom_call.1} parent=1 // pred_fallthru
      _
    // Predicated region
    $region26: #{tpu_custom_call.1} parent=1 // pred_check
      _
    $region27: #{tpu_custom_call.1} parent=1 // pred_check_branch
      %77 = sbr.rel (0) target = $region29
    $region28: #{tpu_custom_call.1} parent=1 // pred_region
      _
    $region29: #{tpu_custom_call.1} parent=1 // pred_fallthru
      _
    // Predicated region
    $region30: #{tpu_custom_call.1} parent=1 // pred_check
      _
    $region31: #{tpu_custom_call.1} parent=1 // pred_check_branch
      %79 = sbr.rel (0) target = $region33
    $region32: #{tpu_custom_call.1} parent=1 // pred_region
      %80 = dma.done [#allocation3], 128
    $region33: #{tpu_custom_call.1} parent=1 // pred_fallthru
      _
    // Predicated region
    $region34: #{tpu_custom_call.1} parent=1 // pred_check
      _
    $region35: #{tpu_custom_call.1} parent=1 // pred_check_branch
      %82 = sbr.rel (0) target = $region37
    $region36: #{tpu_custom_call.1} parent=1 // pred_region
      %83 = dma.done [#allocation6], 128
    $region37: #{tpu_custom_call.1} parent=1 // pred_fallthru
      _
    // Predicated region
    $region38: #{tpu_custom_call.1} parent=1 // pred_check
      _
    $region39: #{tpu_custom_call.1} parent=1 // pred_check_branch
      %85 = sbr.rel (0) target = $region41
    $region40: #{tpu_custom_call.1} parent=1 // pred_region
      %86 = dma.done [#allocation6], 10240
    $region41: #{tpu_custom_call.1} parent=1 // pred_fallthru
      _
    // Predicated region
    $region42: #{tpu_custom_call.1} parent=1 // pred_check
      _
    $region43: #{tpu_custom_call.1} parent=1 // pred_check_branch
      %88 = sbr.rel (0) target = $region45
    $region44: #{tpu_custom_call.1} parent=1 // pred_region
      %89 = dma.done [#allocation9], 160
    $region45: #{tpu_custom_call.1} parent=1 // pred_fallthru
      _
    // Predicated region
    $region46: #{tpu_custom_call.1} parent=1 // pred_check
      _
    $region47: #{tpu_custom_call.1} parent=1 // pred_check_branch
      %91 = sbr.rel (0) target = $region49
    $region48: #{tpu_custom_call.1} parent=1 // pred_region
      %92 = dma.done [#allocation9], 1024
    $region49: #{tpu_custom_call.1} parent=1 // pred_fallthru
      _
    %v94 = vld [vmem:[#allocation2] sm:$0xff]
    %v95 = vpack.c.bf16 %v94, %v94
    %v96 = vld [vmem:[#allocation5] sm:$0xf]
    %v97 = vld [vmem:[#allocation5 + $0x4] sm:$0xf]
    %v98 = vld [vmem:[%s2] sm:$0x1]
    %v100 = vlaneseq
    %v101 = vshrl.u32 %v100, 7
    %v102 = vsub.s32 0, %v101
    %v103 = vrot.slane %v98, %v102
    %v107 = vunpack.c.l.b16 %v96
    %v108 = vunpack.c.l.b16 %v97
    %v109 = vpack.c.b16 %v108, %v107
    %vm111 = vcmask 130048
    %v113 = vsel %vm111, %v95, 0
    %115 = vmatprep.subr.bf16.mxu0 0
    %116 = vmatpush1.bf16.msra.mxu0 0
    %117 = vmatprep.subr.bf16.mxu0 0
    %118 = vmatpush1.bf16.msra.mxu0 0
    %119 = vmatprep.subr.bf16.mxu0 0
    %120 = vmatpush1.bf16.msra.mxu0 0
    %121 = vmatprep.subr.bf16.mxu0 0
    %122 = vmatpush1.bf16.msra.mxu0 0
    %123 = vmatprep.subr.bf16.mxu0 0
    %124 = vmatpush1.bf16.msra.mxu0 0
    %125 = vmatprep.subr.bf16.mxu0 0
    %126 = vmatpush1.bf16.msra.mxu0 0
    %127 = vmatprep.subr.bf16.mxu0 0
    %128 = vmatpush1.bf16.msra.mxu0 0
    %129 = vmatprep.subr.bf16.mxu0 0
    %130 = vmatpush1.bf16.msra.mxu0 %v109
    %131 = vmatprep.subr.bf16.mxu0 0
    %132 = vmatpush2.bf16.msra.mxu0 0
    %133 = vmatprep.subr.bf16.mxu0 0
    %134 = vmatpush2.bf16.msra.mxu0 0
    %135 = vmatprep.subr.bf16.mxu0 0
    %136 = vmatpush2.bf16.msra.mxu0 0
    %137 = vmatprep.subr.bf16.mxu0 0
    %138 = vmatpush2.bf16.msra.mxu0 0
    %139 = vmatprep.subr.bf16.mxu0 0
    %140 = vmatpush2.bf16.msra.mxu0 0
    %141 = vmatprep.subr.bf16.mxu0 0
    %142 = vmatpush2.bf16.msra.mxu0 0
    %143 = vmatprep.subr.bf16.mxu0 0
    %144 = vmatpush2.bf16.msra.mxu0 0
    %145 = vmatprep.subr.bf16.mxu0 0
    %146 = vmatpush2.bf16.msra.mxu0 0
    %147 = vmatprep.mubr.bf16.mxu0 0
    %148 = vmatmul.mubr.bf16.gmra.mxu0 %v113
    %v149 = vpop.f32.mrf.mxu0
    %v150 = vadd.f32 %v103, %v149
    %v151 = vpop.f32.mrf.mxu0
    %v152 = vpop.f32.mrf.mxu0
    %v153 = vpop.f32.mrf.mxu0
    %154 = vdwg.mxu0
    %v155 = vpack.c.bf16 %v150, %v150
    %v156 = vld [vmem:[#allocation7] sm:$0xf]
    %v157 = vld [vmem:[#allocation7 + $0x4] sm:$0xf]
    %v158 = vld [vmem:[#allocation7 + $0x8] sm:$0xf]
    %v159 = vld [vmem:[#allocation7 + $0xc] sm:$0xf]
    %v160 = vld [vmem:[#allocation7 + $0x10] sm:$0xf]
    %v161 = vld [vmem:[#allocation7 + $0x14] sm:$0xf]
    %v162 = vld [vmem:[#allocation7 + $0x18] sm:$0xf]
    %v163 = vld [vmem:[#allocation7 + $0x1c] sm:$0xf]
    %v164 = vld [vmem:[#allocation7 + $0x20] sm:$0xf]
    %v165 = vld [vmem:[#allocation7 + $0x24] sm:$0xf]
    %v166 = vld [vmem:[#allocation7 + $0x28] sm:$0xf]
    %v167 = vld [vmem:[#allocation7 + $0x2c] sm:$0xf]
    %v168 = vld [vmem:[#allocation7 + $0x30] sm:$0xf]
    %v169 = vld [vmem:[#allocation7 + $0x34] sm:$0xf]
    %v170 = vld [vmem:[#allocation7 + $0x38] sm:$0xf]
    %v171 = vld [vmem:[#allocation7 + $0x3c] sm:$0xf]
    %v172 = vld [vmem:[#allocation8] sm:$0x1]
    %v174 = vlaneseq
    %v175 = vshrl.u32 %v174, 7
    %v176 = vsub.s32 0, %v175
    %v177 = vrot.slane %v172, %v176
    %v195 = vunpack.c.l.b16 %v156
    %v196 = vunpack.c.l.b16 %v157
    %v197 = vunpack.c.l.b16 %v158
    %v198 = vunpack.c.l.b16 %v159
    %v199 = vunpack.c.l.b16 %v160
    %v200 = vunpack.c.l.b16 %v161
    %v201 = vunpack.c.l.b16 %v162
    %v202 = vunpack.c.l.b16 %v163
    %v203 = vunpack.c.l.b16 %v164
    %v204 = vunpack.c.l.b16 %v165
    %v205 = vunpack.c.l.b16 %v166
    %v206 = vunpack.c.l.b16 %v167
    %v207 = vunpack.c.l.b16 %v168
    %v208 = vunpack.c.l.b16 %v169
    %v209 = vunpack.c.l.b16 %v170
    %v210 = vunpack.c.l.b16 %v171
    %v211 = vpack.c.b16 %v196, %v195
    %v212 = vpack.c.b16 %v198, %v197
    %v213 = vpack.c.b16 %v200, %v199
    %v214 = vpack.c.b16 %v202, %v201
    %v215 = vpack.c.b16 %v204, %v203
    %v216 = vpack.c.b16 %v206, %v205
    %v217 = vpack.c.b16 %v208, %v207
    %v218 = vpack.c.b16 %v210, %v209
    %227 = vmatprep.subr.bf16.mxu0 0
    %228 = vmatpush1.bf16.msra.mxu0 %v218
    %229 = vmatprep.subr.bf16.mxu0 0
    %230 = vmatpush1.bf16.msra.mxu0 %v217
    %231 = vmatprep.subr.bf16.mxu0 0
    %232 = vmatpush1.bf16.msra.mxu0 %v216
    %233 = vmatprep.subr.bf16.mxu0 0
    %234 = vmatpush1.bf16.msra.mxu0 %v215
    %235 = vmatprep.subr.bf16.mxu0 0
    %236 = vmatpush1.bf16.msra.mxu0 %v214
    %237 = vmatprep.subr.bf16.mxu0 0
    %238 = vmatpush1.bf16.msra.mxu0 %v213
    %239 = vmatprep.subr.bf16.mxu0 0
    %240 = vmatpush1.bf16.msra.mxu0 %v212
    %241 = vmatprep.subr.bf16.mxu0 0
    %242 = vmatpush1.bf16.msra.mxu0 %v211
    %243 = vmatprep.subr.bf16.mxu0 0
    %244 = vmatpush2.bf16.msra.mxu0 0
    %245 = vmatprep.subr.bf16.mxu0 0
    %246 = vmatpush2.bf16.msra.mxu0 0
    %247 = vmatprep.subr.bf16.mxu0 0
    %248 = vmatpush2.bf16.msra.mxu0 0
    %249 = vmatprep.subr.bf16.mxu0 0
    %250 = vmatpush2.bf16.msra.mxu0 0
    %251 = vmatprep.subr.bf16.mxu0 0
    %252 = vmatpush2.bf16.msra.mxu0 0
    %253 = vmatprep.subr.bf16.mxu0 0
    %254 = vmatpush2.bf16.msra.mxu0 0
    %255 = vmatprep.subr.bf16.mxu0 0
    %256 = vmatpush2.bf16.msra.mxu0 0
    %257 = vmatprep.subr.bf16.mxu0 0
    %258 = vmatpush2.bf16.msra.mxu0 0
    %259 = vmatprep.mubr.bf16.mxu0 0
    %260 = vmatmul.mubr.bf16.gmra.mxu0 %v155
    %v261 = vpop.f32.mrf.mxu0
    %v262 = vadd.f32 %v177, %v261
    %v263 = vpop.f32.mrf.mxu0
    %v264 = vpop.f32.mrf.mxu0
    %v265 = vpop.f32.mrf.mxu0
    %266 = vdwg.mxu0
    %v267 = vpack.c.bf16 %v262, %v262
    %s268 = scalar_lea.vmem [#allocation7], 64
    %v269 = vld [vmem:[%s268] sm:$0xf]
    %v270 = vld [vmem:[%s268 + $0x4] sm:$0xf]
    %v271 = vld [vmem:[%s268 + $0x8] sm:$0xf]
    %v272 = vld [vmem:[%s268 + $0xc] sm:$0xf]
    %v273 = vld [vmem:[%s268 + $0x10] sm:$0xf]
    %v274 = vld [vmem:[%s268 + $0x14] sm:$0xf]
    %v275 = vld [vmem:[%s268 + $0x18] sm:$0xf]
    %v276 = vld [vmem:[%s268 + $0x1c] sm:$0xf]
    %v277 = vld [vmem:[%s268 + $0x20] sm:$0xf]
    %v278 = vld [vmem:[%s268 + $0x24] sm:$0xf]
    %v279 = vld [vmem:[%s268 + $0x28] sm:$0xf]
    %v280 = vld [vmem:[%s268 + $0x2c] sm:$0xf]
    %v281 = vld [vmem:[%s268 + $0x30] sm:$0xf]
    %v282 = vld [vmem:[%s268 + $0x34] sm:$0xf]
    %v283 = vld [vmem:[%s268 + $0x38] sm:$0xf]
    %v284 = vld [vmem:[%s268 + $0x3c] sm:$0xf]
    %s285 = scalar_lea.vmem [#allocation8], 1
    %v286 = vld [vmem:[%s285] sm:$0x1]
    %v288 = vlaneseq
    %v289 = vshrl.u32 %v288, 7
    %v290 = vsub.s32 0, %v289
    %v291 = vrot.slane %v286, %v290
    %v309 = vunpack.c.l.b16 %v269
    %v310 = vunpack.c.l.b16 %v270
    %v311 = vunpack.c.l.b16 %v271
    %v312 = vunpack.c.l.b16 %v272
    %v313 = vunpack.c.l.b16 %v273
    %v314 = vunpack.c.l.b16 %v274
    %v315 = vunpack.c.l.b16 %v275
    %v316 = vunpack.c.l.b16 %v276
    %v317 = vunpack.c.l.b16 %v277
    %v318 = vunpack.c.l.b16 %v278
    %v319 = vunpack.c.l.b16 %v279
    %v320 = vunpack.c.l.b16 %v280
    %v321 = vunpack.c.l.b16 %v281
    %v322 = vunpack.c.l.b16 %v282
    %v323 = vunpack.c.l.b16 %v283
    %v324 = vunpack.c.l.b16 %v284
    %v325 = vpack.c.b16 %v310, %v309
    %v326 = vpack.c.b16 %v312, %v311
    %v327 = vpack.c.b16 %v314, %v313
    %v328 = vpack.c.b16 %v316, %v315
    %v329 = vpack.c.b16 %v318, %v317
    %v330 = vpack.c.b16 %v320, %v319
    %v331 = vpack.c.b16 %v322, %v321
    %v332 = vpack.c.b16 %v324, %v323
    %341 = vmatprep.subr.bf16.mxu0 0
    %342 = vmatpush1.bf16.msra.mxu0 %v332
    %343 = vmatprep.subr.bf16.mxu0 0
    %344 = vmatpush1.bf16.msra.mxu0 %v331
    %345 = vmatprep.subr.bf16.mxu0 0
    %346 = vmatpush1.bf16.msra.mxu0 %v330
    %347 = vmatprep.subr.bf16.mxu0 0
    %348 = vmatpush1.bf16.msra.mxu0 %v329
    %349 = vmatprep.subr.bf16.mxu0 0
    %350 = vmatpush1.bf16.msra.mxu0 %v328
    %351 = vmatprep.subr.bf16.mxu0 0
    %352 = vmatpush1.bf16.msra.mxu0 %v327
    %353 = vmatprep.subr.bf16.mxu0 0
    %354 = vmatpush1.bf16.msra.mxu0 %v326
    %355 = vmatprep.subr.bf16.mxu0 0
    %356 = vmatpush1.bf16.msra.mxu0 %v325
    %357 = vmatprep.subr.bf16.mxu0 0
    %358 = vmatpush2.bf16.msra.mxu0 0
    %359 = vmatprep.subr.bf16.mxu0 0
    %360 = vmatpush2.bf16.msra.mxu0 0
    %361 = vmatprep.subr.bf16.mxu0 0
    %362 = vmatpush2.bf16.msra.mxu0 0
    %363 = vmatprep.subr.bf16.mxu0 0
    %364 = vmatpush2.bf16.msra.mxu0 0
    %365 = vmatprep.subr.bf16.mxu0 0
    %366 = vmatpush2.bf16.msra.mxu0 0
    %367 = vmatprep.subr.bf16.mxu0 0
    %368 = vmatpush2.bf16.msra.mxu0 0
    %369 = vmatprep.subr.bf16.mxu0 0
    %370 = vmatpush2.bf16.msra.mxu0 0
    %371 = vmatprep.subr.bf16.mxu0 0
    %372 = vmatpush2.bf16.msra.mxu0 0
    %373 = vmatprep.mubr.bf16.mxu0 0
    %374 = vmatmul.mubr.bf16.gmra.mxu0 %v267
    %v375 = vpop.f32.mrf.mxu0
    %v376 = vadd.f32 %v291, %v375
    %v377 = vpop.f32.mrf.mxu0
    %v378 = vpop.f32.mrf.mxu0
    %v379 = vpop.f32.mrf.mxu0
    %380 = vdwg.mxu0
    %v381 = vpack.c.bf16 %v376, %v376
    %s382 = scalar_lea.vmem [#allocation7], 128
    %v383 = vld [vmem:[%s382] sm:$0xf]
    %v384 = vld [vmem:[%s382 + $0x4] sm:$0xf]
    %v385 = vld [vmem:[%s382 + $0x8] sm:$0xf]
    %v386 = vld [vmem:[%s382 + $0xc] sm:$0xf]
    %v387 = vld [vmem:[%s382 + $0x10] sm:$0xf]
    %v388 = vld [vmem:[%s382 + $0x14] sm:$0xf]
    %v389 = vld [vmem:[%s382 + $0x18] sm:$0xf]
    %v390 = vld [vmem:[%s382 + $0x1c] sm:$0xf]
    %v391 = vld [vmem:[%s382 + $0x20] sm:$0xf]
    %v392 = vld [vmem:[%s382 + $0x24] sm:$0xf]
    %v393 = vld [vmem:[%s382 + $0x28] sm:$0xf]
    %v394 = vld [vmem:[%s382 + $0x2c] sm:$0xf]
    %v395 = vld [vmem:[%s382 + $0x30] sm:$0xf]
    %v396 = vld [vmem:[%s382 + $0x34] sm:$0xf]
    %v397 = vld [vmem:[%s382 + $0x38] sm:$0xf]
    %v398 = vld [vmem:[%s382 + $0x3c] sm:$0xf]
    %s399 = scalar_lea.vmem [#allocation8], 2
    %v400 = vld [vmem:[%s399] sm:$0x1]
    %v402 = vlaneseq
    %v403 = vshrl.u32 %v402, 7
    %v404 = vsub.s32 0, %v403
    %v405 = vrot.slane %v400, %v404
    %v423 = vunpack.c.l.b16 %v383
    %v424 = vunpack.c.l.b16 %v384
    %v425 = vunpack.c.l.b16 %v385
    %v426 = vunpack.c.l.b16 %v386
    %v427 = vunpack.c.l.b16 %v387
    %v428 = vunpack.c.l.b16 %v388
    %v429 = vunpack.c.l.b16 %v389
    %v430 = vunpack.c.l.b16 %v390
    %v431 = vunpack.c.l.b16 %v391
    %v432 = vunpack.c.l.b16 %v392
    %v433 = vunpack.c.l.b16 %v393
    %v434 = vunpack.c.l.b16 %v394
    %v435 = vunpack.c.l.b16 %v395
    %v436 = vunpack.c.l.b16 %v396
    %v437 = vunpack.c.l.b16 %v397
    %v438 = vunpack.c.l.b16 %v398
    %v439 = vpack.c.b16 %v424, %v423
    %v440 = vpack.c.b16 %v426, %v425
    %v441 = vpack.c.b16 %v428, %v427
    %v442 = vpack.c.b16 %v430, %v429
    %v443 = vpack.c.b16 %v432, %v431
    %v444 = vpack.c.b16 %v434, %v433
    %v445 = vpack.c.b16 %v436, %v435
    %v446 = vpack.c.b16 %v438, %v437
    %455 = vmatprep.subr.bf16.mxu0 0
    %456 = vmatpush1.bf16.msra.mxu0 %v446
    %457 = vmatprep.subr.bf16.mxu0 0
    %458 = vmatpush1.bf16.msra.mxu0 %v445
    %459 = vmatprep.subr.bf16.mxu0 0
    %460 = vmatpush1.bf16.msra.mxu0 %v444
    %461 = vmatprep.subr.bf16.mxu0 0
    %462 = vmatpush1.bf16.msra.mxu0 %v443
    %463 = vmatprep.subr.bf16.mxu0 0
    %464 = vmatpush1.bf16.msra.mxu0 %v442
    %465 = vmatprep.subr.bf16.mxu0 0
    %466 = vmatpush1.bf16.msra.mxu0 %v441
    %467 = vmatprep.subr.bf16.mxu0 0
    %468 = vmatpush1.bf16.msra.mxu0 %v440
    %469 = vmatprep.subr.bf16.mxu0 0
    %470 = vmatpush1.bf16.msra.mxu0 %v439
    %471 = vmatprep.subr.bf16.mxu0 0
    %472 = vmatpush2.bf16.msra.mxu0 0
    %473 = vmatprep.subr.bf16.mxu0 0
    %474 = vmatpush2.bf16.msra.mxu0 0
    %475 = vmatprep.subr.bf16.mxu0 0
    %476 = vmatpush2.bf16.msra.mxu0 0
    %477 = vmatprep.subr.bf16.mxu0 0
    %478 = vmatpush2.bf16.msra.mxu0 0
    %479 = vmatprep.subr.bf16.mxu0 0
    %480 = vmatpush2.bf16.msra.mxu0 0
    %481 = vmatprep.subr.bf16.mxu0 0
    %482 = vmatpush2.bf16.msra.mxu0 0
    %483 = vmatprep.subr.bf16.mxu0 0
    %484 = vmatpush2.bf16.msra.mxu0 0
    %485 = vmatprep.subr.bf16.mxu0 0
    %486 = vmatpush2.bf16.msra.mxu0 0
    %487 = vmatprep.mubr.bf16.mxu0 0
    %488 = vmatmul.mubr.bf16.gmra.mxu0 %v381
    %v489 = vpop.f32.mrf.mxu0
    %v490 = vadd.f32 %v405, %v489
    %v491 = vpop.f32.mrf.mxu0
    %v492 = vpop.f32.mrf.mxu0
    %v493 = vpop.f32.mrf.mxu0
    %494 = vdwg.mxu0
    %v495 = vpack.c.bf16 %v490, %v490
    %s496 = scalar_lea.vmem [#allocation7], 192
    %v497 = vld [vmem:[%s496] sm:$0xf]
    %v498 = vld [vmem:[%s496 + $0x4] sm:$0xf]
    %v499 = vld [vmem:[%s496 + $0x8] sm:$0xf]
    %v500 = vld [vmem:[%s496 + $0xc] sm:$0xf]
    %v501 = vld [vmem:[%s496 + $0x10] sm:$0xf]
    %v502 = vld [vmem:[%s496 + $0x14] sm:$0xf]
    %v503 = vld [vmem:[%s496 + $0x18] sm:$0xf]
    %v504 = vld [vmem:[%s496 + $0x1c] sm:$0xf]
    %v505 = vld [vmem:[%s496 + $0x20] sm:$0xf]
    %v506 = vld [vmem:[%s496 + $0x24] sm:$0xf]
    %v507 = vld [vmem:[%s496 + $0x28] sm:$0xf]
    %v508 = vld [vmem:[%s496 + $0x2c] sm:$0xf]
    %v509 = vld [vmem:[%s496 + $0x30] sm:$0xf]
    %v510 = vld [vmem:[%s496 + $0x34] sm:$0xf]
    %v511 = vld [vmem:[%s496 + $0x38] sm:$0xf]
    %v512 = vld [vmem:[%s496 + $0x3c] sm:$0xf]
    %s513 = scalar_lea.vmem [#allocation8], 3
    %v514 = vld [vmem:[%s513] sm:$0x1]
    %v516 = vlaneseq
    %v517 = vshrl.u32 %v516, 7
    %v518 = vsub.s32 0, %v517
    %v519 = vrot.slane %v514, %v518
    %v537 = vunpack.c.l.b16 %v497
    %v538 = vunpack.c.l.b16 %v498
    %v539 = vunpack.c.l.b16 %v499
    %v540 = vunpack.c.l.b16 %v500
    %v541 = vunpack.c.l.b16 %v501
    %v542 = vunpack.c.l.b16 %v502
    %v543 = vunpack.c.l.b16 %v503
    %v544 = vunpack.c.l.b16 %v504
    %v545 = vunpack.c.l.b16 %v505
    %v546 = vunpack.c.l.b16 %v506
    %v547 = vunpack.c.l.b16 %v507
    %v548 = vunpack.c.l.b16 %v508
    %v549 = vunpack.c.l.b16 %v509
    %v550 = vunpack.c.l.b16 %v510
    %v551 = vunpack.c.l.b16 %v511
    %v552 = vunpack.c.l.b16 %v512
    %v553 = vpack.c.b16 %v538, %v537
    %v554 = vpack.c.b16 %v540, %v539
    %v555 = vpack.c.b16 %v542, %v541
    %v556 = vpack.c.b16 %v544, %v543
    %v557 = vpack.c.b16 %v546, %v545
    %v558 = vpack.c.b16 %v548, %v547
    %v559 = vpack.c.b16 %v550, %v549
    %v560 = vpack.c.b16 %v552, %v551
    %569 = vmatprep.subr.bf16.mxu0 0
    %570 = vmatpush1.bf16.msra.mxu0 %v560
    %571 = vmatprep.subr.bf16.mxu0 0
    %572 = vmatpush1.bf16.msra.mxu0 %v559
    %573 = vmatprep.subr.bf16.mxu0 0
    %574 = vmatpush1.bf16.msra.mxu0 %v558
    %575 = vmatprep.subr.bf16.mxu0 0
    %576 = vmatpush1.bf16.msra.mxu0 %v557
    %577 = vmatprep.subr.bf16.mxu0 0
    %578 = vmatpush1.bf16.msra.mxu0 %v556
    %579 = vmatprep.subr.bf16.mxu0 0
    %580 = vmatpush1.bf16.msra.mxu0 %v555
    %581 = vmatprep.subr.bf16.mxu0 0
    %582 = vmatpush1.bf16.msra.mxu0 %v554
    %583 = vmatprep.subr.bf16.mxu0 0
    %584 = vmatpush1.bf16.msra.mxu0 %v553
    %585 = vmatprep.subr.bf16.mxu0 0
    %586 = vmatpush2.bf16.msra.mxu0 0
    %587 = vmatprep.subr.bf16.mxu0 0
    %588 = vmatpush2.bf16.msra.mxu0 0
    %589 = vmatprep.subr.bf16.mxu0 0
    %590 = vmatpush2.bf16.msra.mxu0 0
    %591 = vmatprep.subr.bf16.mxu0 0
    %592 = vmatpush2.bf16.msra.mxu0 0
    %593 = vmatprep.subr.bf16.mxu0 0
    %594 = vmatpush2.bf16.msra.mxu0 0
    %595 = vmatprep.subr.bf16.mxu0 0
    %596 = vmatpush2.bf16.msra.mxu0 0
    %597 = vmatprep.subr.bf16.mxu0 0
    %598 = vmatpush2.bf16.msra.mxu0 0
    %599 = vmatprep.subr.bf16.mxu0 0
    %600 = vmatpush2.bf16.msra.mxu0 0
    %601 = vmatprep.mubr.bf16.mxu0 0
    %602 = vmatmul.mubr.bf16.gmra.mxu0 %v495
    %v603 = vpop.f32.mrf.mxu0
    %v604 = vadd.f32 %v519, %v603
    %v605 = vpop.f32.mrf.mxu0
    %v606 = vpop.f32.mrf.mxu0
    %v607 = vpop.f32.mrf.mxu0
    %608 = vdwg.mxu0
    %v609 = vpack.c.bf16 %v604, %v604
    %s610 = scalar_lea.vmem [#allocation7], 256
    %v611 = vld [vmem:[%s610] sm:$0xf]
    %v612 = vld [vmem:[%s610 + $0x4] sm:$0xf]
    %v613 = vld [vmem:[%s610 + $0x8] sm:$0xf]
    %v614 = vld [vmem:[%s610 + $0xc] sm:$0xf]
    %v615 = vld [vmem:[%s610 + $0x10] sm:$0xf]
    %v616 = vld [vmem:[%s610 + $0x14] sm:$0xf]
    %v617 = vld [vmem:[%s610 + $0x18] sm:$0xf]
    %v618 = vld [vmem:[%s610 + $0x1c] sm:$0xf]
    %v619 = vld [vmem:[%s610 + $0x20] sm:$0xf]
    %v620 = vld [vmem:[%s610 + $0x24] sm:$0xf]
    %v621 = vld [vmem:[%s610 + $0x28] sm:$0xf]
    %v622 = vld [vmem:[%s610 + $0x2c] sm:$0xf]
    %v623 = vld [vmem:[%s610 + $0x30] sm:$0xf]
    %v624 = vld [vmem:[%s610 + $0x34] sm:$0xf]
    %v625 = vld [vmem:[%s610 + $0x38] sm:$0xf]
    %v626 = vld [vmem:[%s610 + $0x3c] sm:$0xf]
    %s627 = scalar_lea.vmem [#allocation8], 4
    %v628 = vld [vmem:[%s627] sm:$0x1]
    %v630 = vlaneseq
    %v631 = vshrl.u32 %v630, 7
    %v632 = vsub.s32 0, %v631
    %v633 = vrot.slane %v628, %v632
    %v651 = vunpack.c.l.b16 %v611
    %v652 = vunpack.c.l.b16 %v612
    %v653 = vunpack.c.l.b16 %v613
    %v654 = vunpack.c.l.b16 %v614
    %v655 = vunpack.c.l.b16 %v615
    %v656 = vunpack.c.l.b16 %v616
    %v657 = vunpack.c.l.b16 %v617
    %v658 = vunpack.c.l.b16 %v618
    %v659 = vunpack.c.l.b16 %v619
    %v660 = vunpack.c.l.b16 %v620
    %v661 = vunpack.c.l.b16 %v621
    %v662 = vunpack.c.l.b16 %v622
    %v663 = vunpack.c.l.b16 %v623
    %v664 = vunpack.c.l.b16 %v624
    %v665 = vunpack.c.l.b16 %v625
    %v666 = vunpack.c.l.b16 %v626
    %v667 = vpack.c.b16 %v652, %v651
    %v668 = vpack.c.b16 %v654, %v653
    %v669 = vpack.c.b16 %v656, %v655
    %v670 = vpack.c.b16 %v658, %v657
    %v671 = vpack.c.b16 %v660, %v659
    %v672 = vpack.c.b16 %v662, %v661
    %v673 = vpack.c.b16 %v664, %v663
    %v674 = vpack.c.b16 %v666, %v665
    %683 = vmatprep.subr.bf16.mxu0 0
    %684 = vmatpush1.bf16.msra.mxu0 %v674
    %685 = vmatprep.subr.bf16.mxu0 0
    %686 = vmatpush1.bf16.msra.mxu0 %v673
    %687 = vmatprep.subr.bf16.mxu0 0
    %688 = vmatpush1.bf16.msra.mxu0 %v672
    %689 = vmatprep.subr.bf16.mxu0 0
    %690 = vmatpush1.bf16.msra.mxu0 %v671
    %691 = vmatprep.subr.bf16.mxu0 0
    %692 = vmatpush1.bf16.msra.mxu0 %v670
    %693 = vmatprep.subr.bf16.mxu0 0
    %694 = vmatpush1.bf16.msra.mxu0 %v669
    %695 = vmatprep.subr.bf16.mxu0 0
    %696 = vmatpush1.bf16.msra.mxu0 %v668
    %697 = vmatprep.subr.bf16.mxu0 0
    %698 = vmatpush1.bf16.msra.mxu0 %v667
    %699 = vmatprep.subr.bf16.mxu0 0
    %700 = vmatpush2.bf16.msra.mxu0 0
    %701 = vmatprep.subr.bf16.mxu0 0
    %702 = vmatpush2.bf16.msra.mxu0 0
    %703 = vmatprep.subr.bf16.mxu0 0
    %704 = vmatpush2.bf16.msra.mxu0 0
    %705 = vmatprep.subr.bf16.mxu0 0
    %706 = vmatpush2.bf16.msra.mxu0 0
    %707 = vmatprep.subr.bf16.mxu0 0
    %708 = vmatpush2.bf16.msra.mxu0 0
    %709 = vmatprep.subr.bf16.mxu0 0
    %710 = vmatpush2.bf16.msra.mxu0 0
    %711 = vmatprep.subr.bf16.mxu0 0
    %712 = vmatpush2.bf16.msra.mxu0 0
    %713 = vmatprep.subr.bf16.mxu0 0
    %714 = vmatpush2.bf16.msra.mxu0 0
    %715 = vmatprep.mubr.bf16.mxu0 0
    %716 = vmatmul.mubr.bf16.gmra.mxu0 %v609
    %v717 = vpop.f32.mrf.mxu0
    %v718 = vadd.f32 %v633, %v717
    %v719 = vpop.f32.mrf.mxu0
    %v720 = vpop.f32.mrf.mxu0
    %v721 = vpop.f32.mrf.mxu0
    %722 = vdwg.mxu0
    %v723 = vpack.c.bf16 %v718, %v718
    %s724 = scalar_lea.vmem [#allocation7], 320
    %v725 = vld [vmem:[%s724] sm:$0xf]
    %v726 = vld [vmem:[%s724 + $0x4] sm:$0xf]
    %v727 = vld [vmem:[%s724 + $0x8] sm:$0xf]
    %v728 = vld [vmem:[%s724 + $0xc] sm:$0xf]
    %v729 = vld [vmem:[%s724 + $0x10] sm:$0xf]
    %v730 = vld [vmem:[%s724 + $0x14] sm:$0xf]
    %v731 = vld [vmem:[%s724 + $0x18] sm:$0xf]
    %v732 = vld [vmem:[%s724 + $0x1c] sm:$0xf]
    %v733 = vld [vmem:[%s724 + $0x20] sm:$0xf]
    %v734 = vld [vmem:[%s724 + $0x24] sm:$0xf]
    %v735 = vld [vmem:[%s724 + $0x28] sm:$0xf]
    %v736 = vld [vmem:[%s724 + $0x2c] sm:$0xf]
    %v737 = vld [vmem:[%s724 + $0x30] sm:$0xf]
    %v738 = vld [vmem:[%s724 + $0x34] sm:$0xf]
    %v739 = vld [vmem:[%s724 + $0x38] sm:$0xf]
    %v740 = vld [vmem:[%s724 + $0x3c] sm:$0xf]
    %s741 = scalar_lea.vmem [#allocation8], 5
    %v742 = vld [vmem:[%s741] sm:$0x1]
    %v744 = vlaneseq
    %v745 = vshrl.u32 %v744, 7
    %v746 = vsub.s32 0, %v745
    %v747 = vrot.slane %v742, %v746
    %v765 = vunpack.c.l.b16 %v725
    %v766 = vunpack.c.l.b16 %v726
    %v767 = vunpack.c.l.b16 %v727
    %v768 = vunpack.c.l.b16 %v728
    %v769 = vunpack.c.l.b16 %v729
    %v770 = vunpack.c.l.b16 %v730
    %v771 = vunpack.c.l.b16 %v731
    %v772 = vunpack.c.l.b16 %v732
    %v773 = vunpack.c.l.b16 %v733
    %v774 = vunpack.c.l.b16 %v734
    %v775 = vunpack.c.l.b16 %v735
    %v776 = vunpack.c.l.b16 %v736
    %v777 = vunpack.c.l.b16 %v737
    %v778 = vunpack.c.l.b16 %v738
    %v779 = vunpack.c.l.b16 %v739
    %v780 = vunpack.c.l.b16 %v740
    %v781 = vpack.c.b16 %v766, %v765
    %v782 = vpack.c.b16 %v768, %v767
    %v783 = vpack.c.b16 %v770, %v769
    %v784 = vpack.c.b16 %v772, %v771
    %v785 = vpack.c.b16 %v774, %v773
    %v786 = vpack.c.b16 %v776, %v775
    %v787 = vpack.c.b16 %v778, %v777
    %v788 = vpack.c.b16 %v780, %v779
    %797 = vmatprep.subr.bf16.mxu0 0
    %798 = vmatpush1.bf16.msra.mxu0 %v788
    %799 = vmatprep.subr.bf16.mxu0 0
    %800 = vmatpush1.bf16.msra.mxu0 %v787
    %801 = vmatprep.subr.bf16.mxu0 0
    %802 = vmatpush1.bf16.msra.mxu0 %v786
    %803 = vmatprep.subr.bf16.mxu0 0
    %804 = vmatpush1.bf16.msra.mxu0 %v785
    %805 = vmatprep.subr.bf16.mxu0 0
    %806 = vmatpush1.bf16.msra.mxu0 %v784
    %807 = vmatprep.subr.bf16.mxu0 0
    %808 = vmatpush1.bf16.msra.mxu0 %v783
    %809 = vmatprep.subr.bf16.mxu0 0
    %810 = vmatpush1.bf16.msra.mxu0 %v782
    %811 = vmatprep.subr.bf16.mxu0 0
    %812 = vmatpush1.bf16.msra.mxu0 %v781
    %813 = vmatprep.subr.bf16.mxu0 0
    %814 = vmatpush2.bf16.msra.mxu0 0
    %815 = vmatprep.subr.bf16.mxu0 0
    %816 = vmatpush2.bf16.msra.mxu0 0
    %817 = vmatprep.subr.bf16.mxu0 0
    %818 = vmatpush2.bf16.msra.mxu0 0
    %819 = vmatprep.subr.bf16.mxu0 0
    %820 = vmatpush2.bf16.msra.mxu0 0
    %821 = vmatprep.subr.bf16.mxu0 0
    %822 = vmatpush2.bf16.msra.mxu0 0
    %823 = vmatprep.subr.bf16.mxu0 0
    %824 = vmatpush2.bf16.msra.mxu0 0
    %825 = vmatprep.subr.bf16.mxu0 0
    %826 = vmatpush2.bf16.msra.mxu0 0
    %827 = vmatprep.subr.bf16.mxu0 0
    %828 = vmatpush2.bf16.msra.mxu0 0
    %829 = vmatprep.mubr.bf16.mxu0 0
    %830 = vmatmul.mubr.bf16.gmra.mxu0 %v723
    %v831 = vpop.f32.mrf.mxu0
    %v832 = vadd.f32 %v747, %v831
    %v833 = vpop.f32.mrf.mxu0
    %v834 = vpop.f32.mrf.mxu0
    %v835 = vpop.f32.mrf.mxu0
    %836 = vdwg.mxu0
    %v837 = vpack.c.bf16 %v832, %v832
    %s838 = scalar_lea.vmem [#allocation7], 384
    %v839 = vld [vmem:[%s838] sm:$0xf]
    %v840 = vld [vmem:[%s838 + $0x4] sm:$0xf]
    %v841 = vld [vmem:[%s838 + $0x8] sm:$0xf]
    %v842 = vld [vmem:[%s838 + $0xc] sm:$0xf]
    %v843 = vld [vmem:[%s838 + $0x10] sm:$0xf]
    %v844 = vld [vmem:[%s838 + $0x14] sm:$0xf]
    %v845 = vld [vmem:[%s838 + $0x18] sm:$0xf]
    %v846 = vld [vmem:[%s838 + $0x1c] sm:$0xf]
    %v847 = vld [vmem:[%s838 + $0x20] sm:$0xf]
    %v848 = vld [vmem:[%s838 + $0x24] sm:$0xf]
    %v849 = vld [vmem:[%s838 + $0x28] sm:$0xf]
    %v850 = vld [vmem:[%s838 + $0x2c] sm:$0xf]
    %v851 = vld [vmem:[%s838 + $0x30] sm:$0xf]
    %v852 = vld [vmem:[%s838 + $0x34] sm:$0xf]
    %v853 = vld [vmem:[%s838 + $0x38] sm:$0xf]
    %v854 = vld [vmem:[%s838 + $0x3c] sm:$0xf]
    %s855 = scalar_lea.vmem [#allocation8], 6
    %v856 = vld [vmem:[%s855] sm:$0x1]
    %v858 = vlaneseq
    %v859 = vshrl.u32 %v858, 7
    %v860 = vsub.s32 0, %v859
    %v861 = vrot.slane %v856, %v860
    %v879 = vunpack.c.l.b16 %v839
    %v880 = vunpack.c.l.b16 %v840
    %v881 = vunpack.c.l.b16 %v841
    %v882 = vunpack.c.l.b16 %v842
    %v883 = vunpack.c.l.b16 %v843
    %v884 = vunpack.c.l.b16 %v844
    %v885 = vunpack.c.l.b16 %v845
    %v886 = vunpack.c.l.b16 %v846
    %v887 = vunpack.c.l.b16 %v847
    %v888 = vunpack.c.l.b16 %v848
    %v889 = vunpack.c.l.b16 %v849
    %v890 = vunpack.c.l.b16 %v850
    %v891 = vunpack.c.l.b16 %v851
    %v892 = vunpack.c.l.b16 %v852
    %v893 = vunpack.c.l.b16 %v853
    %v894 = vunpack.c.l.b16 %v854
    %v895 = vpack.c.b16 %v880, %v879
    %v896 = vpack.c.b16 %v882, %v881
    %v897 = vpack.c.b16 %v884, %v883
    %v898 = vpack.c.b16 %v886, %v885
    %v899 = vpack.c.b16 %v888, %v887
    %v900 = vpack.c.b16 %v890, %v889
    %v901 = vpack.c.b16 %v892, %v891
    %v902 = vpack.c.b16 %v894, %v893
    %911 = vmatprep.subr.bf16.mxu0 0
    %912 = vmatpush1.bf16.msra.mxu0 %v902
    %913 = vmatprep.subr.bf16.mxu0 0
    %914 = vmatpush1.bf16.msra.mxu0 %v901
    %915 = vmatprep.subr.bf16.mxu0 0
    %916 = vmatpush1.bf16.msra.mxu0 %v900
    %917 = vmatprep.subr.bf16.mxu0 0
    %918 = vmatpush1.bf16.msra.mxu0 %v899
    %919 = vmatprep.subr.bf16.mxu0 0
    %920 = vmatpush1.bf16.msra.mxu0 %v898
    %921 = vmatprep.subr.bf16.mxu0 0
    %922 = vmatpush1.bf16.msra.mxu0 %v897
    %923 = vmatprep.subr.bf16.mxu0 0
    %924 = vmatpush1.bf16.msra.mxu0 %v896
    %925 = vmatprep.subr.bf16.mxu0 0
    %926 = vmatpush1.bf16.msra.mxu0 %v895
    %927 = vmatprep.subr.bf16.mxu0 0
    %928 = vmatpush2.bf16.msra.mxu0 0
    %929 = vmatprep.subr.bf16.mxu0 0
    %930 = vmatpush2.bf16.msra.mxu0 0
    %931 = vmatprep.subr.bf16.mxu0 0
    %932 = vmatpush2.bf16.msra.mxu0 0
    %933 = vmatprep.subr.bf16.mxu0 0
    %934 = vmatpush2.bf16.msra.mxu0 0
    %935 = vmatprep.subr.bf16.mxu0 0
    %936 = vmatpush2.bf16.msra.mxu0 0
    %937 = vmatprep.subr.bf16.mxu0 0
    %938 = vmatpush2.bf16.msra.mxu0 0
    %939 = vmatprep.subr.bf16.mxu0 0
    %940 = vmatpush2.bf16.msra.mxu0 0
    %941 = vmatprep.subr.bf16.mxu0 0
    %942 = vmatpush2.bf16.msra.mxu0 0
    %943 = vmatprep.mubr.bf16.mxu0 0
    %944 = vmatmul.mubr.bf16.gmra.mxu0 %v837
    %v945 = vpop.f32.mrf.mxu0
    %v946 = vadd.f32 %v861, %v945
    %v947 = vpop.f32.mrf.mxu0
    %v948 = vpop.f32.mrf.mxu0
    %v949 = vpop.f32.mrf.mxu0
    %950 = vdwg.mxu0
    %v951 = vpack.c.bf16 %v946, %v946
    %s952 = scalar_lea.vmem [#allocation7], 448
    %v953 = vld [vmem:[%s952] sm:$0xf]
    %v954 = vld [vmem:[%s952 + $0x4] sm:$0xf]
    %v955 = vld [vmem:[%s952 + $0x8] sm:$0xf]
    %v956 = vld [vmem:[%s952 + $0xc] sm:$0xf]
    %v957 = vld [vmem:[%s952 + $0x10] sm:$0xf]
    %v958 = vld [vmem:[%s952 + $0x14] sm:$0xf]
    %v959 = vld [vmem:[%s952 + $0x18] sm:$0xf]
    %v960 = vld [vmem:[%s952 + $0x1c] sm:$0xf]
    %v961 = vld [vmem:[%s952 + $0x20] sm:$0xf]
    %v962 = vld [vmem:[%s952 + $0x24] sm:$0xf]
    %v963 = vld [vmem:[%s952 + $0x28] sm:$0xf]
    %v964 = vld [vmem:[%s952 + $0x2c] sm:$0xf]
    %v965 = vld [vmem:[%s952 + $0x30] sm:$0xf]
    %v966 = vld [vmem:[%s952 + $0x34] sm:$0xf]
    %v967 = vld [vmem:[%s952 + $0x38] sm:$0xf]
    %v968 = vld [vmem:[%s952 + $0x3c] sm:$0xf]
    %s969 = scalar_lea.vmem [#allocation8], 7
    %v970 = vld [vmem:[%s969] sm:$0x1]
    %v972 = vlaneseq
    %v973 = vshrl.u32 %v972, 7
    %v974 = vsub.s32 0, %v973
    %v975 = vrot.slane %v970, %v974
    %v993 = vunpack.c.l.b16 %v953
    %v994 = vunpack.c.l.b16 %v954
    %v995 = vunpack.c.l.b16 %v955
    %v996 = vunpack.c.l.b16 %v956
    %v997 = vunpack.c.l.b16 %v957
    %v998 = vunpack.c.l.b16 %v958
    %v999 = vunpack.c.l.b16 %v959
    %v1000 = vunpack.c.l.b16 %v960
    %v1001 = vunpack.c.l.b16 %v961
    %v1002 = vunpack.c.l.b16 %v962
    %v1003 = vunpack.c.l.b16 %v963
    %v1004 = vunpack.c.l.b16 %v964
    %v1005 = vunpack.c.l.b16 %v965
    %v1006 = vunpack.c.l.b16 %v966
    %v1007 = vunpack.c.l.b16 %v967
    %v1008 = vunpack.c.l.b16 %v968
    %v1009 = vpack.c.b16 %v994, %v993
    %v1010 = vpack.c.b16 %v996, %v995
    %v1011 = vpack.c.b16 %v998, %v997
    %v1012 = vpack.c.b16 %v1000, %v999
    %v1013 = vpack.c.b16 %v1002, %v1001
    %v1014 = vpack.c.b16 %v1004, %v1003
    %v1015 = vpack.c.b16 %v1006, %v1005
    %v1016 = vpack.c.b16 %v1008, %v1007
    %1025 = vmatprep.subr.bf16.mxu0 0
    %1026 = vmatpush1.bf16.msra.mxu0 %v1016
    %1027 = vmatprep.subr.bf16.mxu0 0
    %1028 = vmatpush1.bf16.msra.mxu0 %v1015
    %1029 = vmatprep.subr.bf16.mxu0 0
    %1030 = vmatpush1.bf16.msra.mxu0 %v1014
    %1031 = vmatprep.subr.bf16.mxu0 0
    %1032 = vmatpush1.bf16.msra.mxu0 %v1013
    %1033 = vmatprep.subr.bf16.mxu0 0
    %1034 = vmatpush1.bf16.msra.mxu0 %v1012
    %1035 = vmatprep.subr.bf16.mxu0 0
    %1036 = vmatpush1.bf16.msra.mxu0 %v1011
    %1037 = vmatprep.subr.bf16.mxu0 0
    %1038 = vmatpush1.bf16.msra.mxu0 %v1010
    %1039 = vmatprep.subr.bf16.mxu0 0
    %1040 = vmatpush1.bf16.msra.mxu0 %v1009
    %1041 = vmatprep.subr.bf16.mxu0 0
    %1042 = vmatpush2.bf16.msra.mxu0 0
    %1043 = vmatprep.subr.bf16.mxu0 0
    %1044 = vmatpush2.bf16.msra.mxu0 0
    %1045 = vmatprep.subr.bf16.mxu0 0
    %1046 = vmatpush2.bf16.msra.mxu0 0
    %1047 = vmatprep.subr.bf16.mxu0 0
    %1048 = vmatpush2.bf16.msra.mxu0 0
    %1049 = vmatprep.subr.bf16.mxu0 0
    %1050 = vmatpush2.bf16.msra.mxu0 0
    %1051 = vmatprep.subr.bf16.mxu0 0
    %1052 = vmatpush2.bf16.msra.mxu0 0
    %1053 = vmatprep.subr.bf16.mxu0 0
    %1054 = vmatpush2.bf16.msra.mxu0 0
    %1055 = vmatprep.subr.bf16.mxu0 0
    %1056 = vmatpush2.bf16.msra.mxu0 0
    %1057 = vmatprep.mubr.bf16.mxu0 0
    %1058 = vmatmul.mubr.bf16.gmra.mxu0 %v951
    %v1059 = vpop.f32.mrf.mxu0
    %v1060 = vadd.f32 %v975, %v1059
    %v1061 = vpop.f32.mrf.mxu0
    %v1062 = vpop.f32.mrf.mxu0
    %v1063 = vpop.f32.mrf.mxu0
    %1064 = vdwg.mxu0
    %v1065 = vpack.c.bf16 %v1060, %v1060
    %s1066 = scalar_lea.vmem [#allocation7], 512
    %v1067 = vld [vmem:[%s1066] sm:$0xf]
    %v1068 = vld [vmem:[%s1066 + $0x4] sm:$0xf]
    %v1069 = vld [vmem:[%s1066 + $0x8] sm:$0xf]
    %v1070 = vld [vmem:[%s1066 + $0xc] sm:$0xf]
    %v1071 = vld [vmem:[%s1066 + $0x10] sm:$0xf]
    %v1072 = vld [vmem:[%s1066 + $0x14] sm:$0xf]
    %v1073 = vld [vmem:[%s1066 + $0x18] sm:$0xf]
    %v1074 = vld [vmem:[%s1066 + $0x1c] sm:$0xf]
    %v1075 = vld [vmem:[%s1066 + $0x20] sm:$0xf]
    %v1076 = vld [vmem:[%s1066 + $0x24] sm:$0xf]
    %v1077 = vld [vmem:[%s1066 + $0x28] sm:$0xf]
    %v1078 = vld [vmem:[%s1066 + $0x2c] sm:$0xf]
    %v1079 = vld [vmem:[%s1066 + $0x30] sm:$0xf]
    %v1080 = vld [vmem:[%s1066 + $0x34] sm:$0xf]
    %v1081 = vld [vmem:[%s1066 + $0x38] sm:$0xf]
    %v1082 = vld [vmem:[%s1066 + $0x3c] sm:$0xf]
    %s1083 = scalar_lea.vmem [#allocation8], 8
    %v1084 = vld [vmem:[%s1083] sm:$0x1]
    %v1086 = vlaneseq
    %v1087 = vshrl.u32 %v1086, 7
    %v1088 = vsub.s32 0, %v1087
    %v1089 = vrot.slane %v1084, %v1088
    %v1107 = vunpack.c.l.b16 %v1067
    %v1108 = vunpack.c.l.b16 %v1068
    %v1109 = vunpack.c.l.b16 %v1069
    %v1110 = vunpack.c.l.b16 %v1070
    %v1111 = vunpack.c.l.b16 %v1071
    %v1112 = vunpack.c.l.b16 %v1072
    %v1113 = vunpack.c.l.b16 %v1073
    %v1114 = vunpack.c.l.b16 %v1074
    %v1115 = vunpack.c.l.b16 %v1075
    %v1116 = vunpack.c.l.b16 %v1076
    %v1117 = vunpack.c.l.b16 %v1077
    %v1118 = vunpack.c.l.b16 %v1078
    %v1119 = vunpack.c.l.b16 %v1079
    %v1120 = vunpack.c.l.b16 %v1080
    %v1121 = vunpack.c.l.b16 %v1081
    %v1122 = vunpack.c.l.b16 %v1082
    %v1123 = vpack.c.b16 %v1108, %v1107
    %v1124 = vpack.c.b16 %v1110, %v1109
    %v1125 = vpack.c.b16 %v1112, %v1111
    %v1126 = vpack.c.b16 %v1114, %v1113
    %v1127 = vpack.c.b16 %v1116, %v1115
    %v1128 = vpack.c.b16 %v1118, %v1117
    %v1129 = vpack.c.b16 %v1120, %v1119
    %v1130 = vpack.c.b16 %v1122, %v1121
    %1139 = vmatprep.subr.bf16.mxu0 0
    %1140 = vmatpush1.bf16.msra.mxu0 %v1130
    %1141 = vmatprep.subr.bf16.mxu0 0
    %1142 = vmatpush1.bf16.msra.mxu0 %v1129
    %1143 = vmatprep.subr.bf16.mxu0 0
    %1144 = vmatpush1.bf16.msra.mxu0 %v1128
    %1145 = vmatprep.subr.bf16.mxu0 0
    %1146 = vmatpush1.bf16.msra.mxu0 %v1127
    %1147 = vmatprep.subr.bf16.mxu0 0
    %1148 = vmatpush1.bf16.msra.mxu0 %v1126
    %1149 = vmatprep.subr.bf16.mxu0 0
    %1150 = vmatpush1.bf16.msra.mxu0 %v1125
    %1151 = vmatprep.subr.bf16.mxu0 0
    %1152 = vmatpush1.bf16.msra.mxu0 %v1124
    %1153 = vmatprep.subr.bf16.mxu0 0
    %1154 = vmatpush1.bf16.msra.mxu0 %v1123
    %1155 = vmatprep.subr.bf16.mxu0 0
    %1156 = vmatpush2.bf16.msra.mxu0 0
    %1157 = vmatprep.subr.bf16.mxu0 0
    %1158 = vmatpush2.bf16.msra.mxu0 0
    %1159 = vmatprep.subr.bf16.mxu0 0
    %1160 = vmatpush2.bf16.msra.mxu0 0
    %1161 = vmatprep.subr.bf16.mxu0 0
    %1162 = vmatpush2.bf16.msra.mxu0 0
    %1163 = vmatprep.subr.bf16.mxu0 0
    %1164 = vmatpush2.bf16.msra.mxu0 0
    %1165 = vmatprep.subr.bf16.mxu0 0
    %1166 = vmatpush2.bf16.msra.mxu0 0
    %1167 = vmatprep.subr.bf16.mxu0 0
    %1168 = vmatpush2.bf16.msra.mxu0 0
    %1169 = vmatprep.subr.bf16.mxu0 0
    %1170 = vmatpush2.bf16.msra.mxu0 0
    %1171 = vmatprep.mubr.bf16.mxu0 0
    %1172 = vmatmul.mubr.bf16.gmra.mxu0 %v1065
    %v1173 = vpop.f32.mrf.mxu0
    %v1174 = vadd.f32 %v1089, %v1173
    %v1175 = vpop.f32.mrf.mxu0
    %v1176 = vpop.f32.mrf.mxu0
    %v1177 = vpop.f32.mrf.mxu0
    %1178 = vdwg.mxu0
    %v1179 = vpack.c.bf16 %v1174, %v1174
    %s1180 = scalar_lea.vmem [#allocation7], 576
    %v1181 = vld [vmem:[%s1180] sm:$0xf]
    %v1182 = vld [vmem:[%s1180 + $0x4] sm:$0xf]
    %v1183 = vld [vmem:[%s1180 + $0x8] sm:$0xf]
    %v1184 = vld [vmem:[%s1180 + $0xc] sm:$0xf]
    %v1185 = vld [vmem:[%s1180 + $0x10] sm:$0xf]
    %v1186 = vld [vmem:[%s1180 + $0x14] sm:$0xf]
    %v1187 = vld [vmem:[%s1180 + $0x18] sm:$0xf]
    %v1188 = vld [vmem:[%s1180 + $0x1c] sm:$0xf]
    %v1189 = vld [vmem:[%s1180 + $0x20] sm:$0xf]
    %v1190 = vld [vmem:[%s1180 + $0x24] sm:$0xf]
    %v1191 = vld [vmem:[%s1180 + $0x28] sm:$0xf]
    %v1192 = vld [vmem:[%s1180 + $0x2c] sm:$0xf]
    %v1193 = vld [vmem:[%s1180 + $0x30] sm:$0xf]
    %v1194 = vld [vmem:[%s1180 + $0x34] sm:$0xf]
    %v1195 = vld [vmem:[%s1180 + $0x38] sm:$0xf]
    %v1196 = vld [vmem:[%s1180 + $0x3c] sm:$0xf]
    %s1197 = scalar_lea.vmem [#allocation8], 9
    %v1198 = vld [vmem:[%s1197] sm:$0x1]
    %v1200 = vlaneseq
    %v1201 = vshrl.u32 %v1200, 7
    %v1202 = vsub.s32 0, %v1201
    %v1203 = vrot.slane %v1198, %v1202
    %v1221 = vunpack.c.l.b16 %v1181
    %v1222 = vunpack.c.l.b16 %v1182
    %v1223 = vunpack.c.l.b16 %v1183
    %v1224 = vunpack.c.l.b16 %v1184
    %v1225 = vunpack.c.l.b16 %v1185
    %v1226 = vunpack.c.l.b16 %v1186
    %v1227 = vunpack.c.l.b16 %v1187
    %v1228 = vunpack.c.l.b16 %v1188
    %v1229 = vunpack.c.l.b16 %v1189
    %v1230 = vunpack.c.l.b16 %v1190
    %v1231 = vunpack.c.l.b16 %v1191
    %v1232 = vunpack.c.l.b16 %v1192
    %v1233 = vunpack.c.l.b16 %v1193
    %v1234 = vunpack.c.l.b16 %v1194
    %v1235 = vunpack.c.l.b16 %v1195
    %v1236 = vunpack.c.l.b16 %v1196
    %v1237 = vpack.c.b16 %v1222, %v1221
    %v1238 = vpack.c.b16 %v1224, %v1223
    %v1239 = vpack.c.b16 %v1226, %v1225
    %v1240 = vpack.c.b16 %v1228, %v1227
    %v1241 = vpack.c.b16 %v1230, %v1229
    %v1242 = vpack.c.b16 %v1232, %v1231
    %v1243 = vpack.c.b16 %v1234, %v1233
    %v1244 = vpack.c.b16 %v1236, %v1235
    %1253 = vmatprep.subr.bf16.mxu0 0
    %1254 = vmatpush1.bf16.msra.mxu0 %v1244
    %1255 = vmatprep.subr.bf16.mxu0 0
    %1256 = vmatpush1.bf16.msra.mxu0 %v1243
    %1257 = vmatprep.subr.bf16.mxu0 0
    %1258 = vmatpush1.bf16.msra.mxu0 %v1242
    %1259 = vmatprep.subr.bf16.mxu0 0
    %1260 = vmatpush1.bf16.msra.mxu0 %v1241
    %1261 = vmatprep.subr.bf16.mxu0 0
    %1262 = vmatpush1.bf16.msra.mxu0 %v1240
    %1263 = vmatprep.subr.bf16.mxu0 0
    %1264 = vmatpush1.bf16.msra.mxu0 %v1239
    %1265 = vmatprep.subr.bf16.mxu0 0
    %1266 = vmatpush1.bf16.msra.mxu0 %v1238
    %1267 = vmatprep.subr.bf16.mxu0 0
    %1268 = vmatpush1.bf16.msra.mxu0 %v1237
    %1269 = vmatprep.subr.bf16.mxu0 0
    %1270 = vmatpush2.bf16.msra.mxu0 0
    %1271 = vmatprep.subr.bf16.mxu0 0
    %1272 = vmatpush2.bf16.msra.mxu0 0
    %1273 = vmatprep.subr.bf16.mxu0 0
    %1274 = vmatpush2.bf16.msra.mxu0 0
    %1275 = vmatprep.subr.bf16.mxu0 0
    %1276 = vmatpush2.bf16.msra.mxu0 0
    %1277 = vmatprep.subr.bf16.mxu0 0
    %1278 = vmatpush2.bf16.msra.mxu0 0
    %1279 = vmatprep.subr.bf16.mxu0 0
    %1280 = vmatpush2.bf16.msra.mxu0 0
    %1281 = vmatprep.subr.bf16.mxu0 0
    %1282 = vmatpush2.bf16.msra.mxu0 0
    %1283 = vmatprep.subr.bf16.mxu0 0
    %1284 = vmatpush2.bf16.msra.mxu0 0
    %1285 = vmatprep.mubr.bf16.mxu0 0
    %1286 = vmatmul.mubr.bf16.gmra.mxu0 %v1179
    %v1287 = vpop.f32.mrf.mxu0
    %v1288 = vadd.f32 %v1203, %v1287
    %v1289 = vpop.f32.mrf.mxu0
    %v1290 = vpop.f32.mrf.mxu0
    %v1291 = vpop.f32.mrf.mxu0
    %1292 = vdwg.mxu0
    %v1293 = vpack.c.bf16 %v1288, %v1288
    %v1294 = vld [vmem:[#allocation10] sm:$0xf]
    %v1295 = vld [vmem:[#allocation10 + $0x4] sm:$0xf]
    %v1296 = vld [vmem:[#allocation10 + $0x8] sm:$0xf]
    %v1297 = vld [vmem:[#allocation10 + $0xc] sm:$0xf]
    %v1298 = vld [vmem:[#allocation10 + $0x10] sm:$0xf]
    %v1299 = vld [vmem:[#allocation10 + $0x14] sm:$0xf]
    %v1300 = vld [vmem:[#allocation10 + $0x18] sm:$0xf]
    %v1301 = vld [vmem:[#allocation10 + $0x1c] sm:$0xf]
    %v1302 = vld [vmem:[#allocation10 + $0x20] sm:$0xf]
    %v1303 = vld [vmem:[#allocation10 + $0x24] sm:$0xf]
    %v1304 = vld [vmem:[#allocation10 + $0x28] sm:$0xf]
    %v1305 = vld [vmem:[#allocation10 + $0x2c] sm:$0xf]
    %v1306 = vld [vmem:[#allocation10 + $0x30] sm:$0xf]
    %v1307 = vld [vmem:[#allocation10 + $0x34] sm:$0xf]
    %v1308 = vld [vmem:[#allocation10 + $0x38] sm:$0xf]
    %v1309 = vld [vmem:[#allocation10 + $0x3c] sm:$0xf]
    %v1310 = vld [vmem:[%s6] sm:$0x1]
    %v1312 = vlaneseq
    %v1313 = vshrl.u32 %v1312, 7
    %v1314 = vsub.s32 0, %v1313
    %v1315 = vrot.slane %v1310, %v1314
    %v1333 = vunpack.c.l.b16 %v1294
    %v1334 = vunpack.c.l.b16 %v1295
    %v1335 = vunpack.c.l.b16 %v1296
    %v1336 = vunpack.c.l.b16 %v1297
    %v1337 = vunpack.c.l.b16 %v1298
    %v1338 = vunpack.c.l.b16 %v1299
    %v1339 = vunpack.c.l.b16 %v1300
    %v1340 = vunpack.c.l.b16 %v1301
    %v1341 = vunpack.c.l.b16 %v1302
    %v1342 = vunpack.c.l.b16 %v1303
    %v1343 = vunpack.c.l.b16 %v1304
    %v1344 = vunpack.c.l.b16 %v1305
    %v1345 = vunpack.c.l.b16 %v1306
    %v1346 = vunpack.c.l.b16 %v1307
    %v1347 = vunpack.c.l.b16 %v1308
    %v1348 = vunpack.c.l.b16 %v1309
    %v1349 = vpack.c.b16 %v1334, %v1333
    %v1350 = vpack.c.b16 %v1336, %v1335
    %v1351 = vpack.c.b16 %v1338, %v1337
    %v1352 = vpack.c.b16 %v1340, %v1339
    %v1353 = vpack.c.b16 %v1342, %v1341
    %v1354 = vpack.c.b16 %v1344, %v1343
    %v1355 = vpack.c.b16 %v1346, %v1345
    %v1356 = vpack.c.b16 %v1348, %v1347
    %1365 = vmatprep.subr.bf16.mxu0 0
    %1366 = vmatpush1.bf16.msra.mxu0 %v1356
    %1367 = vmatprep.subr.bf16.mxu0 0
    %1368 = vmatpush1.bf16.msra.mxu0 %v1355
    %1369 = vmatprep.subr.bf16.mxu0 0
    %1370 = vmatpush1.bf16.msra.mxu0 %v1354
    %1371 = vmatprep.subr.bf16.mxu0 0
    %1372 = vmatpush1.bf16.msra.mxu0 %v1353
    %1373 = vmatprep.subr.bf16.mxu0 0
    %1374 = vmatpush1.bf16.msra.mxu0 %v1352
    %1375 = vmatprep.subr.bf16.mxu0 0
    %1376 = vmatpush1.bf16.msra.mxu0 %v1351
    %1377 = vmatprep.subr.bf16.mxu0 0
    %1378 = vmatpush1.bf16.msra.mxu0 %v1350
    %1379 = vmatprep.subr.bf16.mxu0 0
    %1380 = vmatpush1.bf16.msra.mxu0 %v1349
    %1381 = vmatprep.subr.bf16.mxu0 0
    %1382 = vmatpush2.bf16.msra.mxu0 0
    %1383 = vmatprep.subr.bf16.mxu0 0
    %1384 = vmatpush2.bf16.msra.mxu0 0
    %1385 = vmatprep.subr.bf16.mxu0 0
    %1386 = vmatpush2.bf16.msra.mxu0 0
    %1387 = vmatprep.subr.bf16.mxu0 0
    %1388 = vmatpush2.bf16.msra.mxu0 0
    %1389 = vmatprep.subr.bf16.mxu0 0
    %1390 = vmatpush2.bf16.msra.mxu0 0
    %1391 = vmatprep.subr.bf16.mxu0 0
    %1392 = vmatpush2.bf16.msra.mxu0 0
    %1393 = vmatprep.subr.bf16.mxu0 0
    %1394 = vmatpush2.bf16.msra.mxu0 0
    %1395 = vmatprep.subr.bf16.mxu0 0
    %1396 = vmatpush2.bf16.msra.mxu0 0
    %1397 = vmatprep.mubr.bf16.mxu0 0
    %1398 = vmatmul.mubr.bf16.gmra.mxu0 %v1293
    %v1399 = vpop.f32.mrf.mxu0
    %v1400 = vadd.f32 %v1315, %v1399
    %v1401 = vpop.f32.mrf.mxu0
    %v1402 = vpop.f32.mrf.mxu0
    %v1403 = vpop.f32.mrf.mxu0
    %1404 = vdwg.mxu0
    %1405 = vst [vmem:[#allocation11] sm:$0xff] %v1400
    // Predicated region
    $region50: #{tpu_custom_call.1} parent=1 // pred_check
      _
    $region51: #{tpu_custom_call.1} parent=1 // pred_check_branch
      %1407 = sbr.rel (0) target = $region53
    $region52: #{tpu_custom_call.1} parent=1 // pred_region
      %s1409 = ssub.s32 128, 128
      %1410 = vsyncadd [#allocation4], %s1409
      %s1412 = sshll.u32 [#allocation11], 4
      %s1413 = int_to_ptr.vmem [resolvable:$true] %s1412
      %1415 = dma.vmem_to_hbm [thread:$0]  %s1413, 128, %s7, [#allocation4]
    $region53: #{tpu_custom_call.1} parent=1 // pred_fallthru
      _
    // Predicated region
    $region54: #{tpu_custom_call.1} parent=1 // pred_check
      _
    $region55: #{tpu_custom_call.1} parent=1 // pred_check_branch
      %1417 = sbr.rel (0) target = $region57
    $region56: #{tpu_custom_call.1} parent=1 // pred_region
      %1418 = dma.done [#allocation4], 128
    $region57: #{tpu_custom_call.1} parent=1 // pred_fallthru
      _
    %1419 = vsyncpa [#allocation3], 1
    %1420 = vsyncpa [#allocation6], 1
    %1421 = vsyncpa [#allocation9], 1
    %1422 = vsyncpa [#allocation4], 1

</llo_original>
